<compile_context>
chip_gen: v5e
topology: v5e:2x2
jax: 0.10.0
libtpu: 0.0.40
codegen_flags: <defaults>
</compile_context>

<pallas_src>
import jax
import jax.numpy as jnp
from jax.experimental import pallas as pl
from jax.experimental.pallas import tpu as pltpu


# ----------------------------------------------------------------------------
# Fused kernel: depth-batched per-pixel MLP -> softmax(T=0.1) -> raw moments
# ----------------------------------------------------------------------------
def _fused_kp_kernel(x_ref, w1t_ref, b1_ref, w2t_ref, b2_ref, ft_ref, out_ref):
    # x_ref  : (C, GD*N)  f32   one batch element, GD depth slices, N = H*W lanes
    # w1t_ref: (HID, C)   bf16  b1_ref: (HID, 1) f32
    # w2t_ref: (KP, HID)  bf16  b2_ref: (KP, 1)  f32
    # ft_ref : (6, N)     f32   lane-dense coord rows [1, gx, gy, gx^2, gx*gy, gy^2]
    # out_ref: (GD*KP, 6) f32   RAW (unnormalized) moments; col 0 == softmax denom z
    feat_t = ft_ref[...]
    kp = b2_ref.shape[0]
    n = feat_t.shape[1]
    gd = out_ref.shape[0] // kp

    # ---- depth-batched per-pixel MLP (hourglass surrogate): two MXU matmuls ----
    # bf16 operands / f32 accumulation == fast single-pass MXU (no HIGHEST here).
    xb = x_ref[...].astype(jnp.bfloat16)                          # (C, GD*N)
    h = jnp.dot(w1t_ref[...], xb,
                preferred_element_type=jnp.float32) + b1_ref[...]  # (HID, GD*N) f32
    h = jnp.maximum(h, 0.0).astype(jnp.bfloat16)
    heat = jnp.dot(w2t_ref[...], h,
                   preferred_element_type=jnp.float32) + b2_ref[...]  # (KP, GD*N) f32

    # ---- per-depth temperature softmax + raw moment matmul -------------------
    # Pack 8//KP depth slices onto the sublane axis so exp/max/moment rows are
    # not half padding (KP=4 -> process depth pairs as an (8, N) tensor).
    pack = 8 // kp if (kp <= 8 and 8 % kp == 0) else 1
    if gd % pack != 0:
        pack = 1

    for g in range(gd // pack):                                   # small static unroll
        cols = [heat[:, (g * pack + p) * n:(g * pack + p + 1) * n]
                for p in range(pack)]                             # lane-aligned slices
        hp = cols[0] if pack == 1 else jnp.concatenate(cols, axis=0)  # (pack*KP, N)
        logits = hp * 10.0                                        # == heat / 0.1
        e = jnp.exp(logits - jnp.max(logits, axis=-1, keepdims=True))
        # raw moments on the MXU; feat row 0 is ones, so mom[:, 0] is the softmax
        # denominator z.  HIGHEST kept only here (tiny matmul) for f32-level accuracy.
        mom = jax.lax.dot_general(
            e, feat_t, (((1,), (1,)), ((), ())),
            preferred_element_type=jnp.float32,
            precision=jax.lax.Precision.HIGHEST)                  # (pack*KP, 6)
        out_ref[pl.ds(g * pack * kp, pack * kp)] = mom


# ----------------------------------------------------------------------------
# Host-side helpers
# ----------------------------------------------------------------------------
def _coord_features_t(h, w):
    # torch: d = linspace(-1,1,h); meshx,meshy = meshgrid(d,d) ('ij');
    #        grid = stack((meshy, meshx), 2) -> grid[...,0]=x, grid[...,1]=y
    # (the torch reference assumes H == W; enforced by the caller)
    del w
    d = jnp.linspace(-1.0, 1.0, h, dtype=jnp.float32)
    meshx, meshy = jnp.meshgrid(d, d, indexing="ij")
    gx = meshy.reshape(-1)                                # x coord (varies along W)
    gy = meshx.reshape(-1)                                # y coord (varies along H)
    ones = jnp.ones_like(gx)
    # lane-dense (6, N) slab (row-major: each coord feature is one sublane row)
    return jnp.stack([ones, gx, gy, gx * gx, gx * gy, gy * gy], axis=0)


def _choose_d_tile(d, kp, c, n, *, vmem_budget=20 << 20, max_unrolled_iters=16):
    """Depth slices per grid step.

    Prefer the full depth (a full-dim block is always legal and collapses the
    depth grid axis); only split when the double-buffered x block would blow
    the VMEM budget or the static softmax/moment unroll would get too long.
    """
    pack = 8 // kp if (kp <= 8 and 8 % kp == 0) else 1
    per_depth = 2 * c * n * 4                  # double-buffered f32 x bytes / depth
    cap = max(1, min(d, vmem_budget // per_depth, max_unrolled_iters * pack))
    if cap >= d:
        return d
    for g in range(cap, 0, -1):                # largest divisor of d that fits
        if d % g == 0:
            return g
    return 1


# ----------------------------------------------------------------------------
# Wrapper reproducing KeyPointDetector.forward
# ----------------------------------------------------------------------------
def keypoint_detector_forward(x, params, *, d_tile=None):
    # x: (B, C, D, H, W) float32
    B, C, D, H, W = x.shape
    assert H == W, "reference make_coordinate_grid assumes square spatial dims"
    N = H * W
    HID = params["w1"].shape[1]
    KP = params["w2"].shape[1]

    GD = _choose_d_tile(D, KP, C, N) if d_tile is None else d_tile
    if B * (D // GD) < 2 and D > 1:            # keep v7x's 2nd TensorCore busy
        for g in range(D // 2, 0, -1):
            if D % g == 0:
                GD = g
                break
    assert D % GD == 0

    x3 = x.reshape(B, C, D * N)                # trailing-dim merge, no copy
    w1t = params["w1"].T.astype(jnp.bfloat16)  # (HID, C)
    w2t = params["w2"].T.astype(jnp.bfloat16)  # (KP, HID)
    b1 = params["b1"].reshape(HID, 1).astype(jnp.float32)
    b2 = params["b2"].reshape(KP, 1).astype(jnp.float32)
    feat_t = _coord_features_t(H, W)           # (6, N) lane-dense

    const = lambda b, dt: (0, 0)               # weights / features stay resident
    raw = pl.pallas_call(
        _fused_kp_kernel,
        out_shape=jax.ShapeDtypeStruct((B, D * KP, 6), jnp.float32),
        grid=(B, D // GD),
        in_specs=[
            pl.BlockSpec((None, C, GD * N), lambda b, dt: (b, 0, dt)),
            pl.BlockSpec((HID, C), const),
            pl.BlockSpec((HID, 1), const),
            pl.BlockSpec((KP, HID), const),
            pl.BlockSpec((KP, 1), const),
            pl.BlockSpec((6, N), const),
        ],
        out_specs=pl.BlockSpec((None, GD * KP, 6), lambda b, dt: (b, dt, 0)),
        compiler_params=pltpu.CompilerParams(
            dimension_semantics=("parallel", "parallel"),
            vmem_limit_bytes=48 * 1024 * 1024),
    )(x3, w1t, b1, w2t, b2, feat_t)

    # --- tiny (B, D, KP, 6) epilogue in plain JAX: normalize, +eps, var fixup ---
    raw = raw.reshape(B, D, KP, 6)
    fsum = jnp.sum(feat_t, axis=1)                      # (6,): sum_n feat[:, n]
    mom = raw / raw[..., 0:1] + 1e-07 * fsum            # moments of (softmax + 1e-07)
    s, mx, my = mom[..., 0], mom[..., 1], mom[..., 2]
    mxx, mxy, myy = mom[..., 3], mom[..., 4], mom[..., 5]
    mean = jnp.stack([mx, my], axis=-1)                 # (B, D, KP, 2)
    c = 2.0 - s
    # sum q (g - mean)(g - mean)^T from non-central moments (f32 cancellation ~1e-7,
    # well within tolerance for |g| <= 1)
    vxx = mxx - c * mx * mx
    vxy = mxy - c * mx * my
    vyy = myy - c * my * my
    var = jnp.stack([vxx, vxy, vxy, vyy], axis=-1).reshape(B, D, KP, 2, 2)
    # TODO(synk): util.visualize_kps(x, kp_array) and e() are debug side effects; skipped.
    return {"mean": mean, "var": var}


# ----------------------------------------------------------------------------
# Pure-JAX reference (mirrors the PyTorch math; same bf16-MLP semantics)
# ----------------------------------------------------------------------------
def reference_forward(x, params):
    B, C, D, H, W = x.shape
    KP = params["w2"].shape[1]
    bf = jnp.bfloat16
    xr = jnp.transpose(x, (0, 2, 3, 4, 1)).reshape(-1, C)
    h = jnp.dot(xr.astype(bf), params["w1"].astype(bf),
                preferred_element_type=jnp.float32) + params["b1"]
    h = jnp.maximum(h, 0.0)
    o = jnp.dot(h.astype(bf), params["w2"].astype(bf),
                preferred_element_type=jnp.float32) + params["b2"]
    heatmap = o.reshape(B, D, H, W, KP).transpose(0, 4, 1, 2, 3)   # (B,KP,D,H,W)

    hm = heatmap.reshape(B, KP, D, -1)
    hm = jax.nn.softmax(hm / 0.1, axis=-1).reshape(B, KP, D, H, W)

    d = jnp.linspace(-1.0, 1.0, H, dtype=jnp.float32)
    meshx, meshy = jnp.meshgrid(d, d, indexing="ij")
    grid = jnp.stack([meshy, meshx], axis=2)              # (H, W, 2)
    mesh = grid[None, None, None]                         # (1,1,1,H,W,2)
    hm5 = hm[..., None] + 1e-07                           # (B,KP,D,H,W,1)
    mean = (hm5 * mesh).sum(axis=(3, 4))                  # (B,KP,D,2)
    var = mesh - mean[:, :, :, None, None, :]
    var = var[..., :, None] * var[..., None, :]
    var = hm5[..., None] * var
    var = var.sum(axis=(3, 4))                            # (B,KP,D,2,2)
    return {"mean": mean.transpose(0, 2, 1, 3), "var": var.transpose(0, 2, 1, 3, 4)}


if __name__ == "__main__":
    # Small shapes consistent with the module: in_features=4, out_features(=num_kp)=4,
    # block_expansion(=hidden)=32, video of B=2, D=4 frames, 16x16 spatial.
    # (D=4 also exercises the sublane depth-pair packing path.)
    B, C, D, H, W = 2, 4, 4, 16, 16
    KP, HID = 4, 32

    key = jax.random.PRNGKey(0)
    kx, k1, k2, k3, k4 = jax.random.split(key, 5)
    x = jax.random.normal(kx, (B, C, D, H, W), dtype=jnp.float32)
    params = {
        "w1": 0.3 * jax.random.normal(k1, (C, HID), dtype=jnp.float32),
        "b1": 0.1 * jax.random.normal(k2, (HID,), dtype=jnp.float32),
        "w2": 0.3 * jax.random.normal(k3, (HID, KP), dtype=jnp.float32),
        "b2": 0.1 * jax.random.normal(k4, (KP,), dtype=jnp.float32),
    }

    kp = jax.jit(keypoint_detector_forward)(x, params)
    jax.block_until_ready(kp)

    ref = reference_forward(x, params)
    assert kp["mean"].shape == (B, D, KP, 2)
    assert kp["var"].shape == (B, D, KP, 2, 2)
    assert jnp.allclose(kp["mean"], ref["mean"], atol=2e-4, rtol=2e-3), (
        float(jnp.max(jnp.abs(kp["mean"] - ref["mean"]))))
    assert jnp.allclose(kp["var"], ref["var"], atol=2e-4, rtol=2e-3), (
        float(jnp.max(jnp.abs(kp["var"] - ref["var"]))))

    print("KERNEL_OK")
</pallas_src>

<mosaic_0001>
module attributes {stable_mosaic.version = 11 : i64} {
  func.func @_fused_kp_kernel(%arg0: i32, %arg1: i32, %arg2: memref<1x4x1024xf32, #tpu.memory_space<vmem>>, %arg3: memref<32x4xbf16, #tpu.memory_space<vmem>>, %arg4: memref<32x1xf32, #tpu.memory_space<vmem>>, %arg5: memref<4x32xbf16, #tpu.memory_space<vmem>>, %arg6: memref<4x1xf32, #tpu.memory_space<vmem>>, %arg7: memref<6x256xf32, #tpu.memory_space<vmem>>, %arg8: memref<1x16x6xf32, #tpu.memory_space<vmem>>) attributes {dimension_semantics = [#tpu.dimension_semantics<parallel>, #tpu.dimension_semantics<parallel>], iteration_bounds = array<i64: 2, 1>, scalar_prefetch = 0 : i64, scratch_operands = 0 : i64, tpu.core_type = #tpu.core_type<tc>, window_params = [{transform_indices = @transform_0, window_bounds = array<i64: 1, 4, 1024>}, {pipeline_mode = #tpu.pipeline_mode<synchronous>, transform_indices = @transform_1, window_bounds = array<i64: 32, 4>}, {pipeline_mode = #tpu.pipeline_mode<synchronous>, transform_indices = @transform_2, window_bounds = array<i64: 32, 1>}, {pipeline_mode = #tpu.pipeline_mode<synchronous>, transform_indices = @transform_3, window_bounds = array<i64: 4, 32>}, {pipeline_mode = #tpu.pipeline_mode<synchronous>, transform_indices = @transform_4, window_bounds = array<i64: 4, 1>}, {pipeline_mode = #tpu.pipeline_mode<synchronous>, transform_indices = @transform_5, window_bounds = array<i64: 6, 256>}, {transform_indices = @transform_6, window_bounds = array<i64: 1, 16, 6>}]} {
    %c0 = arith.constant 0 : index
    %c0_0 = arith.constant 0 : index
    %0 = vector.load %arg7[%c0, %c0_0] : memref<6x256xf32, #tpu.memory_space<vmem>>, vector<6x256xf32>
    %c0_1 = arith.constant 0 : index
    %c0_2 = arith.constant 0 : index
    %c0_3 = arith.constant 0 : index
    %1 = vector.load %arg2[%c0_1, %c0_2, %c0_3] : memref<1x4x1024xf32, #tpu.memory_space<vmem>>, vector<1x4x1024xf32>
    %2 = vector.shape_cast %1 : vector<1x4x1024xf32> to vector<4x1024xf32>
    %3 = arith.truncf %2 : vector<4x1024xf32> to vector<4x1024xbf16>
    %c0_4 = arith.constant 0 : index
    %c0_5 = arith.constant 0 : index
    %4 = vector.load %arg3[%c0_4, %c0_5] : memref<32x4xbf16, #tpu.memory_space<vmem>>, vector<32x4xbf16>
    %cst = arith.constant dense<0.000000e+00> : vector<32x1024xf32>
    %5 = tpu.matmul %4, %3, %cst {dimension_numbers = #tpu.dot_dimension_numbers<[1], [0], [0], [1], [0, 0, 1, 1], [], []>} : vector<32x4xbf16>, vector<4x1024xbf16>, vector<32x1024xf32> -> vector<32x1024xf32>
    %c0_6 = arith.constant 0 : index
    %c0_7 = arith.constant 0 : index
    %6 = vector.load %arg4[%c0_6, %c0_7] : memref<32x1xf32, #tpu.memory_space<vmem>>, vector<32x1xf32>
    %7 = vector.broadcast %6 : vector<32x1xf32> to vector<32x1024xf32>
    %8 = arith.addf %5, %7 : vector<32x1024xf32>
    %cst_8 = arith.constant 0.000000e+00 : f32
    %9 = vector.broadcast %cst_8 : f32 to vector<32x1024xf32>
    %10 = arith.maximumf %8, %9 : vector<32x1024xf32>
    %11 = arith.truncf %10 : vector<32x1024xf32> to vector<32x1024xbf16>
    %c0_9 = arith.constant 0 : index
    %c0_10 = arith.constant 0 : index
    %12 = vector.load %arg5[%c0_9, %c0_10] : memref<4x32xbf16, #tpu.memory_space<vmem>>, vector<4x32xbf16>
    %cst_11 = arith.constant dense<0.000000e+00> : vector<4x1024xf32>
    %13 = tpu.matmul %12, %11, %cst_11 {dimension_numbers = #tpu.dot_dimension_numbers<[1], [0], [0], [1], [0, 0, 1, 1], [], []>} : vector<4x32xbf16>, vector<32x1024xbf16>, vector<4x1024xf32> -> vector<4x1024xf32>
    %c0_12 = arith.constant 0 : index
    %c0_13 = arith.constant 0 : index
    %14 = vector.load %arg6[%c0_12, %c0_13] : memref<4x1xf32, #tpu.memory_space<vmem>>, vector<4x1xf32>
    %15 = vector.broadcast %14 : vector<4x1xf32> to vector<4x1024xf32>
    %16 = arith.addf %13, %15 : vector<4x1024xf32>
    %17 = vector.extract_strided_slice %16 {offsets = [0, 0], sizes = [4, 256], strides = [1, 1]} : vector<4x1024xf32> to vector<4x256xf32>
    %18 = vector.extract_strided_slice %16 {offsets = [0, 256], sizes = [4, 256], strides = [1, 1]} : vector<4x1024xf32> to vector<4x256xf32>
    %19 = tpu.concatenate %17, %18 in 0 : vector<4x256xf32>, vector<4x256xf32> -> vector<8x256xf32>
    %cst_14 = arith.constant 1.000000e+01 : f32
    %20 = vector.broadcast %cst_14 : f32 to vector<8x256xf32>
    %21 = arith.mulf %19, %20 : vector<8x256xf32>
    %cst_15 = arith.constant dense<0xFF800000> : vector<8xf32>
    %22 = vector.multi_reduction <maximumf>, %21, %cst_15 [1] : vector<8x256xf32> to vector<8xf32>
    %23 = vector.shape_cast %22 : vector<8xf32> to vector<8x1xf32>
    %24 = vector.broadcast %23 : vector<8x1xf32> to vector<8x256xf32>
    %25 = arith.subf %21, %24 : vector<8x256xf32>
    %26 = math.exp %25 : vector<8x256xf32>
    %cst_16 = arith.constant dense<0.000000e+00> : vector<8x6xf32>
    %27 = tpu.matmul %26, %0, %cst_16 {dimension_numbers = #tpu.dot_dimension_numbers<[1], [1], [0], [0], [0, 0, 1, 0], [], []>, precision = #tpu.contract_precision<fp32>} : vector<8x256xf32>, vector<6x256xf32>, vector<8x6xf32> -> vector<8x6xf32>
    %c0_17 = arith.constant 0 : index
    %c0_18 = arith.constant 0 : index
    %c0_19 = arith.constant 0 : index
    %28 = vector.load %arg8[%c0_17, %c0_18, %c0_19] : memref<1x16x6xf32, #tpu.memory_space<vmem>>, vector<1x8x6xf32>
    %29 = vector.shape_cast %28 : vector<1x8x6xf32> to vector<8x6xf32>
    %30 = vector.shape_cast %27 : vector<8x6xf32> to vector<1x8x6xf32>
    tpu.vector_store %arg8[%c0_17, %c0_18, %c0_19], %30 {strides = array<i32>} : memref<1x16x6xf32, #tpu.memory_space<vmem>>, vector<1x8x6xf32>,
    %31 = vector.extract_strided_slice %16 {offsets = [0, 512], sizes = [4, 256], strides = [1, 1]} : vector<4x1024xf32> to vector<4x256xf32>
    %32 = vector.extract_strided_slice %16 {offsets = [0, 768], sizes = [4, 256], strides = [1, 1]} : vector<4x1024xf32> to vector<4x256xf32>
    %33 = tpu.concatenate %31, %32 in 0 : vector<4x256xf32>, vector<4x256xf32> -> vector<8x256xf32>
    %cst_20 = arith.constant 1.000000e+01 : f32
    %34 = vector.broadcast %cst_20 : f32 to vector<8x256xf32>
    %35 = arith.mulf %33, %34 : vector<8x256xf32>
    %cst_21 = arith.constant dense<0xFF800000> : vector<8xf32>
    %36 = vector.multi_reduction <maximumf>, %35, %cst_21 [1] : vector<8x256xf32> to vector<8xf32>
    %37 = vector.shape_cast %36 : vector<8xf32> to vector<8x1xf32>
    %38 = vector.broadcast %37 : vector<8x1xf32> to vector<8x256xf32>
    %39 = arith.subf %35, %38 : vector<8x256xf32>
    %40 = math.exp %39 : vector<8x256xf32>
    %cst_22 = arith.constant dense<0.000000e+00> : vector<8x6xf32>
    %41 = tpu.matmul %40, %0, %cst_22 {dimension_numbers = #tpu.dot_dimension_numbers<[1], [1], [0], [0], [0, 0, 1, 0], [], []>, precision = #tpu.contract_precision<fp32>} : vector<8x256xf32>, vector<6x256xf32>, vector<8x6xf32> -> vector<8x6xf32>
    %c0_23 = arith.constant 0 : index
    %c8 = arith.constant 8 : index
    %c0_24 = arith.constant 0 : index
    %42 = vector.load %arg8[%c0_23, %c8, %c0_24] : memref<1x16x6xf32, #tpu.memory_space<vmem>>, vector<1x8x6xf32>
    %43 = vector.shape_cast %42 : vector<1x8x6xf32> to vector<8x6xf32>
    %44 = vector.shape_cast %41 : vector<8x6xf32> to vector<1x8x6xf32>
    tpu.vector_store %arg8[%c0_23, %c8, %c0_24], %44 {strides = array<i32>} : memref<1x16x6xf32, #tpu.memory_space<vmem>>, vector<1x8x6xf32>,
    return
  }
  func.func @transform_0(%arg0: i32, %arg1: i32) -> (i32, i32, i32) {
    %c0_i32 = arith.constant 0 : i32
    %c0_i32_0 = arith.constant 0 : i32
    return %arg0, %c0_i32, %arg1 : i32, i32, i32
  }
  func.func @transform_1(%arg0: i32, %arg1: i32) -> (i32, i32) {
    %c0_i32 = arith.constant 0 : i32
    %c0_i32_0 = arith.constant 0 : i32
    %c0_i32_1 = arith.constant 0 : i32
    return %c0_i32, %c0_i32_0 : i32, i32
  }
  func.func @transform_2(%arg0: i32, %arg1: i32) -> (i32, i32) {
    %c0_i32 = arith.constant 0 : i32
    %c0_i32_0 = arith.constant 0 : i32
    %c0_i32_1 = arith.constant 0 : i32
    return %c0_i32, %c0_i32_0 : i32, i32
  }
  func.func @transform_3(%arg0: i32, %arg1: i32) -> (i32, i32) {
    %c0_i32 = arith.constant 0 : i32
    %c0_i32_0 = arith.constant 0 : i32
    %c0_i32_1 = arith.constant 0 : i32
    return %c0_i32, %c0_i32_0 : i32, i32
  }
  func.func @transform_4(%arg0: i32, %arg1: i32) -> (i32, i32) {
    %c0_i32 = arith.constant 0 : i32
    %c0_i32_0 = arith.constant 0 : i32
    %c0_i32_1 = arith.constant 0 : i32
    return %c0_i32, %c0_i32_0 : i32, i32
  }
  func.func @transform_5(%arg0: i32, %arg1: i32) -> (i32, i32) {
    %c0_i32 = arith.constant 0 : i32
    %c0_i32_0 = arith.constant 0 : i32
    %c0_i32_1 = arith.constant 0 : i32
    return %c0_i32, %c0_i32_0 : i32, i32
  }
  func.func @transform_6(%arg0: i32, %arg1: i32) -> (i32, i32, i32) {
    %c0_i32 = arith.constant 0 : i32
    %c0_i32_0 = arith.constant 0 : i32
    return %arg0, %arg1, %c0_i32 : i32, i32, i32
  }
}

</mosaic_0001>

<llo_original>
// kernel: keypoint_detector_forward.1
$region0: #{keypoint_detector_forward.1}
  #allocation0 [shape = 'u32[]', space=smem, size = 0x4, offset = 0x4, fixed_abs, tag = 'smem constant byte address 0x4 - core index']
  #allocation1 [shape = 'u32[72,128]{1,0:T(1,128)}', space=vmem, size = 0x9000, scoped, tag = 'internal scratch']
  %s0 = inlined_call_operand.vmem [shape: f32[2,4,1024], index: 0, kind: input, shape index: {}]
  %s1 = inlined_call_operand.vmem [shape: bf16[32,4], index: 1, kind: input, shape index: {}]
  %s2 = inlined_call_operand.vmem [shape: f32[32,1], index: 2, kind: input, shape index: {}]
  %s3 = inlined_call_operand.vmem [shape: bf16[4,32], index: 3, kind: input, shape index: {}]
  %s4 = inlined_call_operand.vmem [shape: f32[4,1], index: 4, kind: input, shape index: {}]
  %s5 = inlined_call_operand.vmem [shape: f32[6,256], index: 5, kind: input, shape index: {}]
  %s6 = inlined_call_operand.vmem [shape: f32[2,16,6], index: 6, kind: output, shape index: {}]
  %s7 = sld [smem:[#allocation0]]
  $region57: #{keypoint_detector_forward.1} parent=0
    _
  %s9 = ssub.s32 1, %s7
  %s10 = scalar_select 0, %s9, %s7
  loop: start=0, step=1, limit=4
  $region2: #{keypoint_detector_forward.1} parent=0 // loop_pre_header
    _
  $region3: #{keypoint_detector_forward.1} parent=0 // loop_header
    %s12 = sphi 0, %s16
    %p13 = scmp.ge.s32.totalorder %s12, 4
    %s19 = sphi 0, %s31
    %s20 = sphi 0, %s27
    %s21 = sphi 0, %s19
    %s22 = sphi 0, %s20
    %s23 = sphi 0, %s21
    %s24 = sphi 0, %s22
    %s36 = sphi 0, %s38
    %s39 = sphi 0, %s36
    %s40 = sphi 0, %s39
    %s56 = sphi 0, %s40
    %s60 = sphi 0, %s60
    %s62 = sphi 0, %s60
    %s63 = sphi 0, %s62
    %s77 = sphi 0, %s63
    %s81 = sphi 0, %s81
    %s83 = sphi 0, %s81
    %s84 = sphi 0, %s83
    %s98 = sphi 0, %s84
    %s102 = sphi 0, %s102
    %s104 = sphi 0, %s102
    %s105 = sphi 0, %s104
    %s119 = sphi 0, %s105
    %s123 = sphi 0, %s123
    %s125 = sphi 0, %s123
    %s126 = sphi 0, %s125
    %s140 = sphi 0, %s126
    %s144 = sphi 0, %s144
    %s146 = sphi 0, %s144
    %s147 = sphi 0, %s146
    %s161 = sphi 0, %s147
    %s169 = sphi 0, %s171
    %s172 = sphi 0, %s169
    %s173 = sphi 0, %s172
    %s189 = sphi 0, %s173
  $region4: #{keypoint_detector_forward.1} parent=0 // loop_header_branch
    %15 = sbr.rel (%p13) target = $region8
  $region5: #{keypoint_detector_forward.1} parent=0 // loop_body
    %s17 = ssub.s32 %s12, 1
    %s18 = ssub.s32 %s12, 2
    %s25 = sadd.s32 1, %s20
    %p26 = scmp.ge.s32.totalorder %s25, 1
    %s27 = scalar_select %p26, 0, %s25
    %s28 = sadd.s32 1, %s19
    %s29 = scalar_select %p26, %s28, %s19
    %p30 = scmp.ge.s32.totalorder %s29, 2
    %s31 = scalar_select %p30, 0, %s29
    %s32 = ssub.s32 %s19, %s31
    %s33 = ssub.s32 %s20, %s27
    %s34 = sor.u32 %s32, %s33
    %p35 = scmp.eq.s32.totalorder %s34, 0
    %s37 = sadd.s32 %s36, 1
    %s38 = scalar_select %p35, %s36, %s37
    %p41 = pneg %p35
    %p42 = scmp.eq.s32.totalorder %s12, 1
    %p43 = por %p41, %p42
    %p44 = scmp.ne.s32.totalorder %s36, %s39
    %p45 = scmp.eq.s32.totalorder %s12, 0
    %p46 = por %p44, %p45
    %p47 = scmp.ne.s32.totalorder %s36, %s39
    %p48 = scmp.eq.s32.totalorder %s17, 1
    %p49 = por %p47, %p48
    %p50 = scmp.ne.s32.totalorder %s39, %s40
    %p51 = scmp.eq.s32.totalorder %s17, 0
    %p52 = por %p50, %p51
    %p53 = scmp.ne.s32.totalorder %s39, %s40
    %p54 = scmp.eq.s32.totalorder %s18, 1
    %p55 = por %p53, %p54
    %p57 = scmp.ne.s32.totalorder %s40, %s56
    %p58 = scmp.eq.s32.totalorder %s18, 0
    %p59 = por %p57, %p58
    %s61 = sadd.s32 %s60, 1
    %p64 = scmp.eq.s32.totalorder %s12, 1
    %p65 = scmp.ne.s32.totalorder %s60, %s62
    %p66 = scmp.eq.s32.totalorder %s12, 0
    %p67 = por %p65, %p66
    %p68 = scmp.ne.s32.totalorder %s60, %s62
    %p69 = scmp.eq.s32.totalorder %s17, 1
    %p70 = por %p68, %p69
    %p71 = scmp.ne.s32.totalorder %s62, %s63
    %p72 = scmp.eq.s32.totalorder %s17, 0
    %p73 = por %p71, %p72
    %p74 = scmp.ne.s32.totalorder %s62, %s63
    %p75 = scmp.eq.s32.totalorder %s18, 1
    %p76 = por %p74, %p75
    %p78 = scmp.ne.s32.totalorder %s63, %s77
    %p79 = scmp.eq.s32.totalorder %s18, 0
    %p80 = por %p78, %p79
    %s82 = sadd.s32 %s81, 1
    %p85 = scmp.eq.s32.totalorder %s12, 1
    %p86 = scmp.ne.s32.totalorder %s81, %s83
    %p87 = scmp.eq.s32.totalorder %s12, 0
    %p88 = por %p86, %p87
    %p89 = scmp.ne.s32.totalorder %s81, %s83
    %p90 = scmp.eq.s32.totalorder %s17, 1
    %p91 = por %p89, %p90
    %p92 = scmp.ne.s32.totalorder %s83, %s84
    %p93 = scmp.eq.s32.totalorder %s17, 0
    %p94 = por %p92, %p93
    %p95 = scmp.ne.s32.totalorder %s83, %s84
    %p96 = scmp.eq.s32.totalorder %s18, 1
    %p97 = por %p95, %p96
    %p99 = scmp.ne.s32.totalorder %s84, %s98
    %p100 = scmp.eq.s32.totalorder %s18, 0
    %p101 = por %p99, %p100
    %s103 = sadd.s32 %s102, 1
    %p106 = scmp.eq.s32.totalorder %s12, 1
    %p107 = scmp.ne.s32.totalorder %s102, %s104
    %p108 = scmp.eq.s32.totalorder %s12, 0
    %p109 = por %p107, %p108
    %p110 = scmp.ne.s32.totalorder %s102, %s104
    %p111 = scmp.eq.s32.totalorder %s17, 1
    %p112 = por %p110, %p111
    %p113 = scmp.ne.s32.totalorder %s104, %s105
    %p114 = scmp.eq.s32.totalorder %s17, 0
    %p115 = por %p113, %p114
    %p116 = scmp.ne.s32.totalorder %s104, %s105
    %p117 = scmp.eq.s32.totalorder %s18, 1
    %p118 = por %p116, %p117
    %p120 = scmp.ne.s32.totalorder %s105, %s119
    %p121 = scmp.eq.s32.totalorder %s18, 0
    %p122 = por %p120, %p121
    %s124 = sadd.s32 %s123, 1
    %p127 = scmp.eq.s32.totalorder %s12, 1
    %p128 = scmp.ne.s32.totalorder %s123, %s125
    %p129 = scmp.eq.s32.totalorder %s12, 0
    %p130 = por %p128, %p129
    %p131 = scmp.ne.s32.totalorder %s123, %s125
    %p132 = scmp.eq.s32.totalorder %s17, 1
    %p133 = por %p131, %p132
    %p134 = scmp.ne.s32.totalorder %s125, %s126
    %p135 = scmp.eq.s32.totalorder %s17, 0
    %p136 = por %p134, %p135
    %p137 = scmp.ne.s32.totalorder %s125, %s126
    %p138 = scmp.eq.s32.totalorder %s18, 1
    %p139 = por %p137, %p138
    %p141 = scmp.ne.s32.totalorder %s126, %s140
    %p142 = scmp.eq.s32.totalorder %s18, 0
    %p143 = por %p141, %p142
    %s145 = sadd.s32 %s144, 1
    %p148 = scmp.eq.s32.totalorder %s12, 1
    %p149 = scmp.ne.s32.totalorder %s144, %s146
    %p150 = scmp.eq.s32.totalorder %s12, 0
    %p151 = por %p149, %p150
    %p152 = scmp.ne.s32.totalorder %s144, %s146
    %p153 = scmp.eq.s32.totalorder %s17, 1
    %p154 = por %p152, %p153
    %p155 = scmp.ne.s32.totalorder %s146, %s147
    %p156 = scmp.eq.s32.totalorder %s17, 0
    %p157 = por %p155, %p156
    %p158 = scmp.ne.s32.totalorder %s146, %s147
    %p159 = scmp.eq.s32.totalorder %s18, 1
    %p160 = por %p158, %p159
    %p162 = scmp.ne.s32.totalorder %s147, %s161
    %p163 = scmp.eq.s32.totalorder %s18, 0
    %p164 = por %p162, %p163
    %s165 = ssub.s32 %s19, %s31
    %s166 = ssub.s32 %s20, %s27
    %s167 = sor.u32 %s165, %s166
    %p168 = scmp.eq.s32.totalorder %s167, 0
    %s170 = sadd.s32 %s169, 1
    %s171 = scalar_select %p168, %s169, %s170
    %p174 = pneg %p168
    %p175 = scmp.eq.s32.totalorder %s12, 1
    %p176 = por %p174, %p175
    %p177 = scmp.ne.s32.totalorder %s169, %s172
    %p178 = scmp.eq.s32.totalorder %s12, 0
    %p179 = por %p177, %p178
    %p180 = scmp.ne.s32.totalorder %s169, %s172
    %p181 = scmp.eq.s32.totalorder %s17, 1
    %p182 = por %p180, %p181
    %p183 = scmp.ne.s32.totalorder %s172, %s173
    %p184 = scmp.eq.s32.totalorder %s17, 0
    %p185 = por %p183, %p184
    %p186 = scmp.ne.s32.totalorder %s172, %s173
    %p187 = scmp.eq.s32.totalorder %s18, 1
    %p188 = por %p186, %p187
    %p190 = scmp.ne.s32.totalorder %s173, %s189
    %p191 = scmp.eq.s32.totalorder %s18, 0
    %p192 = por %p190, %p191
    %p193 = scmp.le.s32.totalorder 1, %s12
    %p194 = scmp.lt.s32.totalorder %s12, 3
    %p195 = pnand %p193, %p194
    %p196 = pneg %p195
    // Predicated region
    $region9: #{keypoint_detector_forward.1} parent=5 // pred_check
      _
    $region10: #{keypoint_detector_forward.1} parent=5 // pred_check_branch
      %198 = sbr.rel (%p195) target = $region12
    $region11: #{keypoint_detector_forward.1} parent=5 // pred_region
      %s199 = ssub.s32 %s12, 1
      // Predicated region
      $region13: #{keypoint_detector_forward.1} parent=11 // pred_check
        %p200 = pneg %p73
      $region14: #{keypoint_detector_forward.1} parent=11 // pred_check_branch
        %202 = sbr.rel (%p200) target = $region16
      $region15: #{keypoint_detector_forward.1} parent=11 // pred_region
        _
      $region16: #{keypoint_detector_forward.1} parent=11 // pred_fallthru
        _
      // Predicated region
      $region17: #{keypoint_detector_forward.1} parent=11 // pred_check
        %p203 = pneg %p94
      $region18: #{keypoint_detector_forward.1} parent=11 // pred_check_branch
        %205 = sbr.rel (%p203) target = $region20
      $region19: #{keypoint_detector_forward.1} parent=11 // pred_region
        _
      $region20: #{keypoint_detector_forward.1} parent=11 // pred_fallthru
        _
      // Predicated region
      $region21: #{keypoint_detector_forward.1} parent=11 // pred_check
        %p206 = pneg %p115
      $region22: #{keypoint_detector_forward.1} parent=11 // pred_check_branch
        %208 = sbr.rel (%p206) target = $region24
      $region23: #{keypoint_detector_forward.1} parent=11 // pred_region
        _
      $region24: #{keypoint_detector_forward.1} parent=11 // pred_fallthru
        _
      // Predicated region
      $region25: #{keypoint_detector_forward.1} parent=11 // pred_check
        %p209 = pneg %p136
      $region26: #{keypoint_detector_forward.1} parent=11 // pred_check_branch
        %211 = sbr.rel (%p209) target = $region28
      $region27: #{keypoint_detector_forward.1} parent=11 // pred_region
        _
      $region28: #{keypoint_detector_forward.1} parent=11 // pred_fallthru
        _
      // Predicated region
      $region29: #{keypoint_detector_forward.1} parent=11 // pred_check
        %p212 = pneg %p157
      $region30: #{keypoint_detector_forward.1} parent=11 // pred_check_branch
        %214 = sbr.rel (%p212) target = $region32
      $region31: #{keypoint_detector_forward.1} parent=11 // pred_region
        _
      $region32: #{keypoint_detector_forward.1} parent=11 // pred_fallthru
        _
    $region12: #{keypoint_detector_forward.1} parent=5 // pred_fallthru
      _
    %p215 = scmp.lt.s32.totalorder %s12, 2
    // Predicated region
    $region33: #{keypoint_detector_forward.1} parent=5 // pred_check
      %p216 = pneg %p215
    $region34: #{keypoint_detector_forward.1} parent=5 // pred_check_branch
      %218 = sbr.rel (%p216) target = $region36
    $region35: #{keypoint_detector_forward.1} parent=5 // pred_region
      // Predicated region
      $region37: #{keypoint_detector_forward.1} parent=35 // pred_check
        %p219 = pneg %p46
      $region38: #{keypoint_detector_forward.1} parent=35 // pred_check_branch
        %221 = sbr.rel (%p219) target = $region40
      $region39: #{keypoint_detector_forward.1} parent=35 // pred_region
        %s222 = smul.u32 8, %s20
        %p223 = scmp.lt.s32.totalorder %s19, 1
        %s224 = scalar_select %p223, %s19, 1
        %p225 = scmp.lt.s32.totalorder %s222, 7
        %s226 = scalar_select %p225, %s222, 7
        %s227 = smul.addr %s224, 8
        %s228 = sadd.s32 %s226, %s227
        %s229 = smul.addr %s228, 4
        %s230 = scalar_lea.vmem %s0, %s229
        %s231 = smul.u32 8, %s20
      $region40: #{keypoint_detector_forward.1} parent=35 // pred_fallthru
        _
    $region36: #{keypoint_detector_forward.1} parent=5 // pred_fallthru
      _
    %p232 = scmp.le.s32.totalorder 1, %s12
    %p233 = scmp.lt.s32.totalorder %s12, 3
    %p234 = pnand %p232, %p233
    %p235 = pneg %p234
    // Predicated region
    $region41: #{keypoint_detector_forward.1} parent=5 // pred_check
      _
    $region42: #{keypoint_detector_forward.1} parent=5 // pred_check_branch
      %237 = sbr.rel (%p234) target = $region44
    $region43: #{keypoint_detector_forward.1} parent=5 // pred_region
      %s238 = ssub.s32 %s12, 1
      %s239 = smul.u32 8, %s22
      %p240 = scmp.lt.s32.totalorder %s21, 1
      %s241 = scalar_select %p240, %s21, 1
      %p242 = scmp.lt.s32.totalorder %s239, 7
      %s243 = scalar_select %p242, %s239, 7
      %s244 = smul.addr %s241, 8
      %s245 = sadd.s32 %s243, %s244
      %s246 = smul.addr %s245, 4
      %s247 = scalar_lea.vmem %s0, %s246
      %p248 = pneg %p52
      %p249 = pneg %p49
      %p250 = pneg %p73
      %p251 = pneg %p70
      %p252 = pneg %p94
      %p253 = pneg %p91
      %p254 = pneg %p115
      %p255 = pneg %p112
      %p256 = pneg %p136
      %p257 = pneg %p133
      %p258 = pneg %p157
      %p259 = pneg %p154
      %p260 = pneg %p185
      %p261 = pneg %p182
      %s262 = smul.u32 2, %s22
      %p263 = scmp.lt.s32.totalorder %s21, 1
      %s264 = scalar_select %p263, %s21, 1
      %p265 = scmp.lt.s32.totalorder %s262, 1
      %s266 = scalar_select %p265, %s262, 1
      %s267 = smul.addr %s264, 2
      %s268 = sadd.s32 %s266, %s267
      %s269 = smul.addr %s268, 8
      %s270 = scalar_lea.vmem %s6, %s269
      %s271 = smul.u32 8, %s22
      %p272 = scmp.lt.s32.totalorder %s21, 1
      %s273 = scalar_select %p272, %s21, 1
      %p274 = scmp.lt.s32.totalorder %s271, 7
      %s275 = scalar_select %p274, %s271, 7
      %s276 = smul.addr %s273, 8
      %s277 = sadd.s32 %s275, %s276
      %s278 = smul.addr %s277, 4
      %s279 = scalar_lea.vmem %s0, %s278
      %s280 = smul.u32 8, %s22
      %s281 = smul.u32 2, %s22
      %p282 = scmp.lt.s32.totalorder %s21, 1
      %s283 = scalar_select %p282, %s21, 1
      %p284 = scmp.lt.s32.totalorder %s281, 1
      %s285 = scalar_select %p284, %s281, 1
      %s286 = smul.addr %s283, 2
      %s287 = sadd.s32 %s285, %s286
      %s288 = smul.addr %s287, 8
      %s289 = scalar_lea.vmem %s6, %s288
      %s290 = smul.u32 2, %s22
      %v292 = vld [vmem:[%s5] sm:$0x3f]
      %v293 = vld [vmem:[%s5 + $0x8] sm:$0x3f]
      %v294 = vld [vmem:[%s279] sm:$0xff]
      %v295 = vld [vmem:[%s279 + $0x8] sm:$0xff]
      %v296 = vld [vmem:[%s279 + $0x10] sm:$0xff]
      %v297 = vld [vmem:[%s279 + $0x18] sm:$0xff]
      %302 = vst [vmem:[#allocation1] ss:$2 sm:$0xff] %v294
      %s303 = scalar_lea.vmem [#allocation1], 16
      %304 = vst [vmem:[%s303] ss:$2 sm:$0xff] %v295
      %s305 = scalar_lea.vmem [#allocation1], 32
      %306 = vst [vmem:[%s305] ss:$2 sm:$0xff] %v296
      %s307 = scalar_lea.vmem [#allocation1], 48
      %308 = vst [vmem:[%s307] ss:$2 sm:$0xff] %v297
      %v309 = vld.sshfl [vmem:[#allocation1] sm:$0xff pattern:$0x75316420]
      %v310 = vld.sshfl [vmem:[#allocation1 + $0x8] sm:$0xff pattern:$0x75316420]
      %v311 = vld.sshfl [vmem:[#allocation1 + $0x10] sm:$0xff pattern:$0x75316420]
      %v312 = vld.sshfl [vmem:[#allocation1 + $0x18] sm:$0xff pattern:$0x75316420]
      %v313 = vld.sshfl [vmem:[#allocation1 + $0x20] sm:$0xff pattern:$0x75316420]
      %v314 = vld.sshfl [vmem:[#allocation1 + $0x28] sm:$0xff pattern:$0x75316420]
      %v315 = vld.sshfl [vmem:[#allocation1 + $0x30] sm:$0xff pattern:$0x75316420]
      %v316 = vld.sshfl [vmem:[#allocation1 + $0x38] sm:$0xff pattern:$0x75316420]
      %v325 = vpack.c.bf16 %v309, %v309
      %v326 = vpack.c.bf16 %v310, %v310
      %v327 = vpack.c.bf16 %v311, %v311
      %v328 = vpack.c.bf16 %v312, %v312
      %v329 = vpack.c.bf16 %v313, %v313
      %v330 = vpack.c.bf16 %v314, %v314
      %v331 = vpack.c.bf16 %v315, %v315
      %v332 = vpack.c.bf16 %v316, %v316
      %v333 = vld [vmem:[%s1] sm:$0xf]
      %v334 = vld [vmem:[%s1 + $0x4] sm:$0xf]
      %v335 = vld [vmem:[%s1 + $0x8] sm:$0xf]
      %v336 = vld [vmem:[%s1 + $0xc] sm:$0xf]
      %v337 = vld [vmem:[%s2] sm:$0xff]
      %v338 = vld [vmem:[%s2 + $0x8] sm:$0xff]
      %v339 = vld [vmem:[%s2 + $0x10] sm:$0xff]
      %v340 = vld [vmem:[%s2 + $0x18] sm:$0xff]
      %342 = vset.pattern.permute.xlu0 0
      %343 = vperm.xlu0 %342, %v337
      %v344 = vpop.permute.xlu0 %343
      %347 = vset.pattern.permute.xlu0 0
      %348 = vperm.xlu0 %347, %v338
      %v349 = vpop.permute.xlu0 %348
      %352 = vset.pattern.permute.xlu0 0
      %353 = vperm.xlu0 %352, %v339
      %v354 = vpop.permute.xlu0 %353
      %357 = vset.pattern.permute.xlu0 0
      %358 = vperm.xlu0 %357, %v340
      %v359 = vpop.permute.xlu0 %358
      %v365 = vunpack.c.l.b16 %v333
      %v366 = vunpack.c.l.b16 %v334
      %v367 = vunpack.c.l.b16 %v335
      %v368 = vunpack.c.l.b16 %v336
      %v369 = vpack.c.b16 %v366, %v365
      %v370 = vpack.c.b16 %v368, %v367
      %vm371 = vcmask 31744
      %v373 = vsel %vm371, %v369, 0
      %v376 = vsel %vm371, %v370, 0
      %vm378 = vcmask 1041408
      %v380 = vsel %vm378, %v325, 0
      %v383 = vsel %vm378, %v326, 0
      %v386 = vsel %vm378, %v327, 0
      %v389 = vsel %vm378, %v328, 0
      %v392 = vsel %vm378, %v329, 0
      %v395 = vsel %vm378, %v330, 0
      %v398 = vsel %vm378, %v331, 0
      %v401 = vsel %vm378, %v332, 0
      %403 = vmatpush.bf16.msra.mxu0 0
      %404 = vmatpush.bf16.msra.mxu0 0
      %405 = vmatpush.bf16.msra.mxu0 0
      %406 = vmatpush.bf16.msra.mxu0 0
      %407 = vmatpush.bf16.msra.mxu0 0
      %408 = vmatpush.bf16.msra.mxu0 0
      %409 = vmatpush.bf16.msra.mxu0 0
      %410 = vmatpush.bf16.msra.mxu0 %v380
      %411 = vmatmul.bf16.gmra.mxu0 %v373
      %v412 = vpop.f32.mrf.mxu0
      %v413 = vadd.f32 %v344, %v412
      %v414 = vpop.f32.mrf.mxu0
      %v415 = vadd.f32 %v349, %v414
      %416 = vmatmul.bf16.gmra.mxu0 %v376
      %v417 = vpop.f32.mrf.mxu0
      %v418 = vadd.f32 %v354, %v417
      %v419 = vpop.f32.mrf.mxu0
      %v420 = vadd.f32 %v359, %v419
      %421 = vdwg.mxu0
      %422 = vmatpush.bf16.msra.mxu0 0
      %423 = vmatpush.bf16.msra.mxu0 0
      %424 = vmatpush.bf16.msra.mxu0 0
      %425 = vmatpush.bf16.msra.mxu0 0
      %426 = vmatpush.bf16.msra.mxu0 0
      %427 = vmatpush.bf16.msra.mxu0 0
      %428 = vmatpush.bf16.msra.mxu0 0
      %429 = vmatpush.bf16.msra.mxu0 %v383
      %430 = vmatmul.bf16.gmra.mxu0 %v373
      %v431 = vpop.f32.mrf.mxu0
      %v432 = vadd.f32 %v344, %v431
      %v433 = vpop.f32.mrf.mxu0
      %v434 = vadd.f32 %v349, %v433
      %435 = vmatmul.bf16.gmra.mxu0 %v376
      %v436 = vpop.f32.mrf.mxu0
      %v437 = vadd.f32 %v354, %v436
      %v438 = vpop.f32.mrf.mxu0
      %v439 = vadd.f32 %v359, %v438
      %440 = vdwg.mxu0
      %441 = vmatpush.bf16.msra.mxu0 0
      %442 = vmatpush.bf16.msra.mxu0 0
      %443 = vmatpush.bf16.msra.mxu0 0
      %444 = vmatpush.bf16.msra.mxu0 0
      %445 = vmatpush.bf16.msra.mxu0 0
      %446 = vmatpush.bf16.msra.mxu0 0
      %447 = vmatpush.bf16.msra.mxu0 0
      %448 = vmatpush.bf16.msra.mxu0 %v386
      %449 = vmatmul.bf16.gmra.mxu0 %v373
      %v450 = vpop.f32.mrf.mxu0
      %v451 = vadd.f32 %v344, %v450
      %v452 = vpop.f32.mrf.mxu0
      %v453 = vadd.f32 %v349, %v452
      %454 = vmatmul.bf16.gmra.mxu0 %v376
      %v455 = vpop.f32.mrf.mxu0
      %v456 = vadd.f32 %v354, %v455
      %v457 = vpop.f32.mrf.mxu0
      %v458 = vadd.f32 %v359, %v457
      %459 = vdwg.mxu0
      %460 = vmatpush.bf16.msra.mxu0 0
      %461 = vmatpush.bf16.msra.mxu0 0
      %462 = vmatpush.bf16.msra.mxu0 0
      %463 = vmatpush.bf16.msra.mxu0 0
      %464 = vmatpush.bf16.msra.mxu0 0
      %465 = vmatpush.bf16.msra.mxu0 0
      %466 = vmatpush.bf16.msra.mxu0 0
      %467 = vmatpush.bf16.msra.mxu0 %v389
      %468 = vmatmul.bf16.gmra.mxu0 %v373
      %v469 = vpop.f32.mrf.mxu0
      %v470 = vadd.f32 %v344, %v469
      %v471 = vpop.f32.mrf.mxu0
      %v472 = vadd.f32 %v349, %v471
      %473 = vmatmul.bf16.gmra.mxu0 %v376
      %v474 = vpop.f32.mrf.mxu0
      %v475 = vadd.f32 %v354, %v474
      %v476 = vpop.f32.mrf.mxu0
      %v477 = vadd.f32 %v359, %v476
      %478 = vdwg.mxu0
      %479 = vmatpush.bf16.msra.mxu0 0
      %480 = vmatpush.bf16.msra.mxu0 0
      %481 = vmatpush.bf16.msra.mxu0 0
      %482 = vmatpush.bf16.msra.mxu0 0
      %483 = vmatpush.bf16.msra.mxu0 0
      %484 = vmatpush.bf16.msra.mxu0 0
      %485 = vmatpush.bf16.msra.mxu0 0
      %486 = vmatpush.bf16.msra.mxu0 %v392
      %487 = vmatmul.bf16.gmra.mxu0 %v373
      %v488 = vpop.f32.mrf.mxu0
      %v489 = vadd.f32 %v344, %v488
      %v490 = vpop.f32.mrf.mxu0
      %v491 = vadd.f32 %v349, %v490
      %492 = vmatmul.bf16.gmra.mxu0 %v376
      %v493 = vpop.f32.mrf.mxu0
      %v494 = vadd.f32 %v354, %v493
      %v495 = vpop.f32.mrf.mxu0
      %v496 = vadd.f32 %v359, %v495
      %497 = vdwg.mxu0
      %498 = vmatpush.bf16.msra.mxu0 0
      %499 = vmatpush.bf16.msra.mxu0 0
      %500 = vmatpush.bf16.msra.mxu0 0
      %501 = vmatpush.bf16.msra.mxu0 0
      %502 = vmatpush.bf16.msra.mxu0 0
      %503 = vmatpush.bf16.msra.mxu0 0
      %504 = vmatpush.bf16.msra.mxu0 0
      %505 = vmatpush.bf16.msra.mxu0 %v395
      %506 = vmatmul.bf16.gmra.mxu0 %v373
      %v507 = vpop.f32.mrf.mxu0
      %v508 = vadd.f32 %v344, %v507
      %v509 = vpop.f32.mrf.mxu0
      %v510 = vadd.f32 %v349, %v509
      %511 = vmatmul.bf16.gmra.mxu0 %v376
      %v512 = vpop.f32.mrf.mxu0
      %v513 = vadd.f32 %v354, %v512
      %v514 = vpop.f32.mrf.mxu0
      %v515 = vadd.f32 %v359, %v514
      %516 = vdwg.mxu0
      %517 = vmatpush.bf16.msra.mxu0 0
      %518 = vmatpush.bf16.msra.mxu0 0
      %519 = vmatpush.bf16.msra.mxu0 0
      %520 = vmatpush.bf16.msra.mxu0 0
      %521 = vmatpush.bf16.msra.mxu0 0
      %522 = vmatpush.bf16.msra.mxu0 0
      %523 = vmatpush.bf16.msra.mxu0 0
      %524 = vmatpush.bf16.msra.mxu0 %v398
      %525 = vmatmul.bf16.gmra.mxu0 %v373
      %v526 = vpop.f32.mrf.mxu0
      %v527 = vadd.f32 %v344, %v526
      %v528 = vpop.f32.mrf.mxu0
      %v529 = vadd.f32 %v349, %v528
      %530 = vmatmul.bf16.gmra.mxu0 %v376
      %v531 = vpop.f32.mrf.mxu0
      %v532 = vadd.f32 %v354, %v531
      %v533 = vpop.f32.mrf.mxu0
      %v534 = vadd.f32 %v359, %v533
      %535 = vdwg.mxu0
      %536 = vmatpush.bf16.msra.mxu0 0
      %537 = vmatpush.bf16.msra.mxu0 0
      %538 = vmatpush.bf16.msra.mxu0 0
      %539 = vmatpush.bf16.msra.mxu0 0
      %540 = vmatpush.bf16.msra.mxu0 0
      %541 = vmatpush.bf16.msra.mxu0 0
      %542 = vmatpush.bf16.msra.mxu0 0
      %543 = vmatpush.bf16.msra.mxu0 %v401
      %544 = vmatmul.bf16.gmra.mxu0 %v373
      %v545 = vpop.f32.mrf.mxu0
      %v546 = vadd.f32 %v344, %v545
      %v547 = vpop.f32.mrf.mxu0
      %v548 = vadd.f32 %v349, %v547
      %549 = vmatmul.bf16.gmra.mxu0 %v376
      %v550 = vpop.f32.mrf.mxu0
      %v551 = vadd.f32 %v354, %v550
      %v552 = vpop.f32.mrf.mxu0
      %v553 = vadd.f32 %v359, %v552
      %554 = vdwg.mxu0
      %v555 = vmax.f32 %v413, 0.0
      %v556 = vmax.f32 %v432, 0.0
      %v557 = vmax.f32 %v451, 0.0
      %v558 = vmax.f32 %v470, 0.0
      %v559 = vmax.f32 %v489, 0.0
      %v560 = vmax.f32 %v508, 0.0
      %v561 = vmax.f32 %v527, 0.0
      %v562 = vmax.f32 %v546, 0.0
      %v563 = vmax.f32 %v415, 0.0
      %v564 = vmax.f32 %v434, 0.0
      %v565 = vmax.f32 %v453, 0.0
      %v566 = vmax.f32 %v472, 0.0
      %v567 = vmax.f32 %v491, 0.0
      %v568 = vmax.f32 %v510, 0.0
      %v569 = vmax.f32 %v529, 0.0
      %v570 = vmax.f32 %v548, 0.0
      %v571 = vmax.f32 %v418, 0.0
      %v572 = vmax.f32 %v437, 0.0
      %v573 = vmax.f32 %v456, 0.0
      %v574 = vmax.f32 %v475, 0.0
      %v575 = vmax.f32 %v494, 0.0
      %v576 = vmax.f32 %v513, 0.0
      %v577 = vmax.f32 %v532, 0.0
      %v578 = vmax.f32 %v551, 0.0
      %v579 = vmax.f32 %v420, 0.0
      %v580 = vmax.f32 %v439, 0.0
      %v581 = vmax.f32 %v458, 0.0
      %v582 = vmax.f32 %v477, 0.0
      %v583 = vmax.f32 %v496, 0.0
      %v584 = vmax.f32 %v515, 0.0
      %v585 = vmax.f32 %v534, 0.0
      %v586 = vmax.f32 %v553, 0.0
      %v587 = vpack.c.bf16 %v563, %v555
      %v588 = vpack.c.bf16 %v564, %v556
      %v589 = vpack.c.bf16 %v565, %v557
      %v590 = vpack.c.bf16 %v566, %v558
      %v591 = vpack.c.bf16 %v567, %v559
      %v592 = vpack.c.bf16 %v568, %v560
      %v593 = vpack.c.bf16 %v569, %v561
      %v594 = vpack.c.bf16 %v570, %v562
      %v595 = vpack.c.bf16 %v579, %v571
      %v596 = vpack.c.bf16 %v580, %v572
      %v597 = vpack.c.bf16 %v581, %v573
      %v598 = vpack.c.bf16 %v582, %v574
      %v599 = vpack.c.bf16 %v583, %v575
      %v600 = vpack.c.bf16 %v584, %v576
      %v601 = vpack.c.bf16 %v585, %v577
      %v602 = vpack.c.bf16 %v586, %v578
      %v603 = vld [vmem:[%s3] sm:$0x3]
      %v604 = vld [vmem:[%s4] sm:$0xf]
      %606 = vset.pattern.permute.xlu0 0
      %607 = vperm.xlu0 %606, %v604
      %v608 = vpop.permute.xlu0 %607
      %vm610 = vcmask 261120
      %v612 = vsel %vm610, %v603, 0
      %614 = vmatpush.bf16.msra.mxu0 0
      %615 = vmatpush.bf16.msra.mxu0 0
      %616 = vmatpush.bf16.msra.mxu0 0
      %617 = vmatpush.bf16.msra.mxu0 0
      %618 = vmatpush.bf16.msra.mxu0 0
      %619 = vmatpush.bf16.msra.mxu0 0
      %620 = vmatpush.bf16.msra.mxu0 %v595
      %621 = vmatpush.bf16.msra.mxu0 %v587
      %622 = vmatmul.bf16.gmra.mxu0 %v612
      %v623 = vpop.f32.mrf.mxu0
      %v624 = vadd.f32 %v608, %v623
      %v625 = vpop.f32.mrf.mxu0
      %626 = vdwg.mxu0
      %627 = vmatpush.bf16.msra.mxu0 0
      %628 = vmatpush.bf16.msra.mxu0 0
      %629 = vmatpush.bf16.msra.mxu0 0
      %630 = vmatpush.bf16.msra.mxu0 0
      %631 = vmatpush.bf16.msra.mxu0 0
      %632 = vmatpush.bf16.msra.mxu0 0
      %633 = vmatpush.bf16.msra.mxu0 %v596
      %634 = vmatpush.bf16.msra.mxu0 %v588
      %635 = vmatmul.bf16.gmra.mxu0 %v612
      %v636 = vpop.f32.mrf.mxu0
      %v637 = vadd.f32 %v608, %v636
      %v638 = vpop.f32.mrf.mxu0
      %639 = vdwg.mxu0
      %640 = vmatpush.bf16.msra.mxu0 0
      %641 = vmatpush.bf16.msra.mxu0 0
      %642 = vmatpush.bf16.msra.mxu0 0
      %643 = vmatpush.bf16.msra.mxu0 0
      %644 = vmatpush.bf16.msra.mxu0 0
      %645 = vmatpush.bf16.msra.mxu0 0
      %646 = vmatpush.bf16.msra.mxu0 %v597
      %647 = vmatpush.bf16.msra.mxu0 %v589
      %648 = vmatmul.bf16.gmra.mxu0 %v612
      %v649 = vpop.f32.mrf.mxu0
      %v650 = vadd.f32 %v608, %v649
      %v651 = vpop.f32.mrf.mxu0
      %652 = vdwg.mxu0
      %653 = vmatpush.bf16.msra.mxu0 0
      %654 = vmatpush.bf16.msra.mxu0 0
      %655 = vmatpush.bf16.msra.mxu0 0
      %656 = vmatpush.bf16.msra.mxu0 0
      %657 = vmatpush.bf16.msra.mxu0 0
      %658 = vmatpush.bf16.msra.mxu0 0
      %659 = vmatpush.bf16.msra.mxu0 %v598
      %660 = vmatpush.bf16.msra.mxu0 %v590
      %661 = vmatmul.bf16.gmra.mxu0 %v612
      %v662 = vpop.f32.mrf.mxu0
      %v663 = vadd.f32 %v608, %v662
      %v664 = vpop.f32.mrf.mxu0
      %665 = vdwg.mxu0
      %666 = vmatpush.bf16.msra.mxu0 0
      %667 = vmatpush.bf16.msra.mxu0 0
      %668 = vmatpush.bf16.msra.mxu0 0
      %669 = vmatpush.bf16.msra.mxu0 0
      %670 = vmatpush.bf16.msra.mxu0 0
      %671 = vmatpush.bf16.msra.mxu0 0
      %672 = vmatpush.bf16.msra.mxu0 %v599
      %673 = vmatpush.bf16.msra.mxu0 %v591
      %674 = vmatmul.bf16.gmra.mxu0 %v612
      %v675 = vpop.f32.mrf.mxu0
      %v676 = vadd.f32 %v608, %v675
      %v677 = vpop.f32.mrf.mxu0
      %678 = vdwg.mxu0
      %679 = vmatpush.bf16.msra.mxu0 0
      %680 = vmatpush.bf16.msra.mxu0 0
      %681 = vmatpush.bf16.msra.mxu0 0
      %682 = vmatpush.bf16.msra.mxu0 0
      %683 = vmatpush.bf16.msra.mxu0 0
      %684 = vmatpush.bf16.msra.mxu0 0
      %685 = vmatpush.bf16.msra.mxu0 %v600
      %686 = vmatpush.bf16.msra.mxu0 %v592
      %687 = vmatmul.bf16.gmra.mxu0 %v612
      %v688 = vpop.f32.mrf.mxu0
      %v689 = vadd.f32 %v608, %v688
      %v690 = vpop.f32.mrf.mxu0
      %691 = vdwg.mxu0
      %692 = vmatpush.bf16.msra.mxu0 0
      %693 = vmatpush.bf16.msra.mxu0 0
      %694 = vmatpush.bf16.msra.mxu0 0
      %695 = vmatpush.bf16.msra.mxu0 0
      %696 = vmatpush.bf16.msra.mxu0 0
      %697 = vmatpush.bf16.msra.mxu0 0
      %698 = vmatpush.bf16.msra.mxu0 %v601
      %699 = vmatpush.bf16.msra.mxu0 %v593
      %700 = vmatmul.bf16.gmra.mxu0 %v612
      %v701 = vpop.f32.mrf.mxu0
      %v702 = vadd.f32 %v608, %v701
      %v703 = vpop.f32.mrf.mxu0
      %704 = vdwg.mxu0
      %705 = vmatpush.bf16.msra.mxu0 0
      %706 = vmatpush.bf16.msra.mxu0 0
      %707 = vmatpush.bf16.msra.mxu0 0
      %708 = vmatpush.bf16.msra.mxu0 0
      %709 = vmatpush.bf16.msra.mxu0 0
      %710 = vmatpush.bf16.msra.mxu0 0
      %711 = vmatpush.bf16.msra.mxu0 %v602
      %712 = vmatpush.bf16.msra.mxu0 %v594
      %713 = vmatmul.bf16.gmra.mxu0 %v612
      %v714 = vpop.f32.mrf.mxu0
      %v715 = vadd.f32 %v608, %v714
      %v716 = vpop.f32.mrf.mxu0
      %717 = vdwg.mxu0
      %v720 = vrot.slane %v650, 4
      %v721 = vrot.slane %v663, 4
      %vm724 = vcmask 1043456
      %v725 = vsel %vm724, %v624, %v720
      %v726 = vsel %vm724, %v637, %v721
      %v727 = vmul.f32 %v725, 10.0
      %v728 = vmul.f32 %v726, 10.0
      %v729 = vmax.f32 %v727, %v728
      %730 = vmax.xlane.f32.xlu0 %v729
      %v731 = vpop.xlane.xlu0 %730
      %v732 = vsub.f32 %v727, %v731
      %v733 = vsub.f32 %v728, %v731
      %v734 = vmul.f32 %v732, 1.442695
      %v735 = vpow.pop %v734
      %v736 = vmul.f32 %v733, 1.442695
      %v737 = vpow.pop %v736
      %738 = vmatpush.xpose.msra.mxu0 0.0
      %739 = vmatpush.xpose.msra.mxu0 0.0
      %740 = vmatpush.xpose.msra.mxu0 0.0
      %741 = vmatpush.xpose.msra.mxu0 0.0
      %742 = vmatpush.xpose.msra.mxu0 0.0
      %743 = vmatpush.xpose.msra.mxu0 0.0
      %744 = vmatpush.xpose.msra.mxu0 0.0
      %745 = vmatpush.xpose.msra.mxu0 0.0
      %746 = vmatpush.xpose.msra.mxu0 0.0
      %747 = vmatpush.xpose.msra.mxu0 0.0
      %748 = vmatpush.xpose.msra.mxu0 0.0
      %749 = vmatpush.xpose.msra.mxu0 0.0
      %750 = vmatpush.xpose.msra.mxu0 0.0
      %751 = vmatpush.xpose.msra.mxu0 0.0
      %752 = vmatpush.xpose.msra.mxu0 0.0
      %v753 = vand.u32 %v292, 4294901760
      %754 = vmatpush.xpose.msra.mxu0 %v753
      %v755 = vand.u32 %v735, 4294901760
      %v756 = vsub.f32 %v735, %v755
      %v757 = vand.u32 %v756, 4294901760
      %v758 = vsub.f32 %v756, %v757
      %v759 = vand.u32 %v758, 4294901760
      %760 = vmatmul.f32.gmra.mxu0 %v759
      %v761 = vpop.f32.mrf.mxu0
      %v762 = vadd.f32 0.0, %v761
      %763 = vdwg.mxu0
      %764 = vmatpush.xpose.msra.mxu0 0.0
      %765 = vmatpush.xpose.msra.mxu0 0.0
      %766 = vmatpush.xpose.msra.mxu0 0.0
      %767 = vmatpush.xpose.msra.mxu0 0.0
      %768 = vmatpush.xpose.msra.mxu0 0.0
      %769 = vmatpush.xpose.msra.mxu0 0.0
      %770 = vmatpush.xpose.msra.mxu0 0.0
      %771 = vmatpush.xpose.msra.mxu0 0.0
      %772 = vmatpush.xpose.msra.mxu0 0.0
      %773 = vmatpush.xpose.msra.mxu0 0.0
      %774 = vmatpush.xpose.msra.mxu0 0.0
      %775 = vmatpush.xpose.msra.mxu0 0.0
      %776 = vmatpush.xpose.msra.mxu0 0.0
      %777 = vmatpush.xpose.msra.mxu0 0.0
      %778 = vmatpush.xpose.msra.mxu0 0.0
      %v779 = vand.u32 %v292, 4294901760
      %v780 = vsub.f32 %v292, %v779
      %v781 = vand.u32 %v780, 4294901760
      %v782 = vsub.f32 %v780, %v781
      %v783 = vand.u32 %v782, 4294901760
      %784 = vmatpush.xpose.msra.mxu0 %v783
      %v785 = vand.u32 %v735, 4294901760
      %786 = vmatmul.f32.gmra.mxu0 %v785
      %v787 = vpop.f32.mrf.mxu0
      %v788 = vadd.f32 %v762, %v787
      %789 = vdwg.mxu0
      %790 = vmatpush.xpose.msra.mxu0 0.0
      %791 = vmatpush.xpose.msra.mxu0 0.0
      %792 = vmatpush.xpose.msra.mxu0 0.0
      %793 = vmatpush.xpose.msra.mxu0 0.0
      %794 = vmatpush.xpose.msra.mxu0 0.0
      %795 = vmatpush.xpose.msra.mxu0 0.0
      %796 = vmatpush.xpose.msra.mxu0 0.0
      %797 = vmatpush.xpose.msra.mxu0 0.0
      %798 = vmatpush.xpose.msra.mxu0 0.0
      %799 = vmatpush.xpose.msra.mxu0 0.0
      %800 = vmatpush.xpose.msra.mxu0 0.0
      %801 = vmatpush.xpose.msra.mxu0 0.0
      %802 = vmatpush.xpose.msra.mxu0 0.0
      %803 = vmatpush.xpose.msra.mxu0 0.0
      %804 = vmatpush.xpose.msra.mxu0 0.0
      %v805 = vand.u32 %v292, 4294901760
      %v806 = vsub.f32 %v292, %v805
      %807 = vmatpush.xpose.msra.mxu0 %v806
      %v808 = vand.u32 %v735, 4294901760
      %v809 = vsub.f32 %v735, %v808
      %810 = vmatmul.f32.gmra.mxu0 %v809
      %v811 = vpop.f32.mrf.mxu0
      %v812 = vadd.f32 %v788, %v811
      %813 = vdwg.mxu0
      %814 = vmatpush.xpose.msra.mxu0 0.0
      %815 = vmatpush.xpose.msra.mxu0 0.0
      %816 = vmatpush.xpose.msra.mxu0 0.0
      %817 = vmatpush.xpose.msra.mxu0 0.0
      %818 = vmatpush.xpose.msra.mxu0 0.0
      %819 = vmatpush.xpose.msra.mxu0 0.0
      %820 = vmatpush.xpose.msra.mxu0 0.0
      %821 = vmatpush.xpose.msra.mxu0 0.0
      %822 = vmatpush.xpose.msra.mxu0 0.0
      %823 = vmatpush.xpose.msra.mxu0 0.0
      %824 = vmatpush.xpose.msra.mxu0 0.0
      %825 = vmatpush.xpose.msra.mxu0 0.0
      %826 = vmatpush.xpose.msra.mxu0 0.0
      %827 = vmatpush.xpose.msra.mxu0 0.0
      %828 = vmatpush.xpose.msra.mxu0 0.0
      %v829 = vand.u32 %v292, 4294901760
      %830 = vmatpush.xpose.msra.mxu0 %v829
      %v831 = vand.u32 %v735, 4294901760
      %v832 = vsub.f32 %v735, %v831
      %v833 = vand.u32 %v832, 4294901760
      %834 = vmatmul.f32.gmra.mxu0 %v833
      %v835 = vpop.f32.mrf.mxu0
      %v836 = vadd.f32 %v812, %v835
      %837 = vdwg.mxu0
      %838 = vmatpush.xpose.msra.mxu0 0.0
      %839 = vmatpush.xpose.msra.mxu0 0.0
      %840 = vmatpush.xpose.msra.mxu0 0.0
      %841 = vmatpush.xpose.msra.mxu0 0.0
      %842 = vmatpush.xpose.msra.mxu0 0.0
      %843 = vmatpush.xpose.msra.mxu0 0.0
      %844 = vmatpush.xpose.msra.mxu0 0.0
      %845 = vmatpush.xpose.msra.mxu0 0.0
      %846 = vmatpush.xpose.msra.mxu0 0.0
      %847 = vmatpush.xpose.msra.mxu0 0.0
      %848 = vmatpush.xpose.msra.mxu0 0.0
      %849 = vmatpush.xpose.msra.mxu0 0.0
      %850 = vmatpush.xpose.msra.mxu0 0.0
      %851 = vmatpush.xpose.msra.mxu0 0.0
      %852 = vmatpush.xpose.msra.mxu0 0.0
      %v853 = vand.u32 %v292, 4294901760
      %v854 = vsub.f32 %v292, %v853
      %v855 = vand.u32 %v854, 4294901760
      %856 = vmatpush.xpose.msra.mxu0 %v855
      %v857 = vand.u32 %v735, 4294901760
      %858 = vmatmul.f32.gmra.mxu0 %v857
      %v859 = vpop.f32.mrf.mxu0
      %v860 = vadd.f32 %v836, %v859
      %861 = vdwg.mxu0
      %862 = vmatpush.xpose.msra.mxu0 0.0
      %863 = vmatpush.xpose.msra.mxu0 0.0
      %864 = vmatpush.xpose.msra.mxu0 0.0
      %865 = vmatpush.xpose.msra.mxu0 0.0
      %866 = vmatpush.xpose.msra.mxu0 0.0
      %867 = vmatpush.xpose.msra.mxu0 0.0
      %868 = vmatpush.xpose.msra.mxu0 0.0
      %869 = vmatpush.xpose.msra.mxu0 0.0
      %870 = vmatpush.xpose.msra.mxu0 0.0
      %871 = vmatpush.xpose.msra.mxu0 0.0
      %872 = vmatpush.xpose.msra.mxu0 0.0
      %873 = vmatpush.xpose.msra.mxu0 0.0
      %874 = vmatpush.xpose.msra.mxu0 0.0
      %875 = vmatpush.xpose.msra.mxu0 0.0
      %876 = vmatpush.xpose.msra.mxu0 0.0
      %v877 = vand.u32 %v292, 4294901760
      %878 = vmatpush.xpose.msra.mxu0 %v877
      %v879 = vand.u32 %v735, 4294901760
      %880 = vmatmul.f32.gmra.mxu0 %v879
      %v881 = vpop.f32.mrf.mxu0
      %v882 = vadd.f32 %v860, %v881
      %883 = vdwg.mxu0
      %884 = vmatpush.xpose.msra.mxu0 0.0
      %885 = vmatpush.xpose.msra.mxu0 0.0
      %886 = vmatpush.xpose.msra.mxu0 0.0
      %887 = vmatpush.xpose.msra.mxu0 0.0
      %888 = vmatpush.xpose.msra.mxu0 0.0
      %889 = vmatpush.xpose.msra.mxu0 0.0
      %890 = vmatpush.xpose.msra.mxu0 0.0
      %891 = vmatpush.xpose.msra.mxu0 0.0
      %892 = vmatpush.xpose.msra.mxu0 0.0
      %893 = vmatpush.xpose.msra.mxu0 0.0
      %894 = vmatpush.xpose.msra.mxu0 0.0
      %895 = vmatpush.xpose.msra.mxu0 0.0
      %896 = vmatpush.xpose.msra.mxu0 0.0
      %897 = vmatpush.xpose.msra.mxu0 0.0
      %898 = vmatpush.xpose.msra.mxu0 0.0
      %v899 = vand.u32 %v293, 4294901760
      %900 = vmatpush.xpose.msra.mxu0 %v899
      %v901 = vand.u32 %v737, 4294901760
      %v902 = vsub.f32 %v737, %v901
      %v903 = vand.u32 %v902, 4294901760
      %v904 = vsub.f32 %v902, %v903
      %v905 = vand.u32 %v904, 4294901760
      %906 = vmatmul.f32.gmra.mxu0 %v905
      %v907 = vpop.f32.mrf.mxu0
      %v908 = vadd.f32 %v882, %v907
      %909 = vdwg.mxu0
      %910 = vmatpush.xpose.msra.mxu0 0.0
      %911 = vmatpush.xpose.msra.mxu0 0.0
      %912 = vmatpush.xpose.msra.mxu0 0.0
      %913 = vmatpush.xpose.msra.mxu0 0.0
      %914 = vmatpush.xpose.msra.mxu0 0.0
      %915 = vmatpush.xpose.msra.mxu0 0.0
      %916 = vmatpush.xpose.msra.mxu0 0.0
      %917 = vmatpush.xpose.msra.mxu0 0.0
      %918 = vmatpush.xpose.msra.mxu0 0.0
      %919 = vmatpush.xpose.msra.mxu0 0.0
      %920 = vmatpush.xpose.msra.mxu0 0.0
      %921 = vmatpush.xpose.msra.mxu0 0.0
      %922 = vmatpush.xpose.msra.mxu0 0.0
      %923 = vmatpush.xpose.msra.mxu0 0.0
      %924 = vmatpush.xpose.msra.mxu0 0.0
      %v925 = vand.u32 %v293, 4294901760
      %v926 = vsub.f32 %v293, %v925
      %v927 = vand.u32 %v926, 4294901760
      %v928 = vsub.f32 %v926, %v927
      %v929 = vand.u32 %v928, 4294901760
      %930 = vmatpush.xpose.msra.mxu0 %v929
      %v931 = vand.u32 %v737, 4294901760
      %932 = vmatmul.f32.gmra.mxu0 %v931
      %v933 = vpop.f32.mrf.mxu0
      %v934 = vadd.f32 %v908, %v933
      %935 = vdwg.mxu0
      %936 = vmatpush.xpose.msra.mxu0 0.0
      %937 = vmatpush.xpose.msra.mxu0 0.0
      %938 = vmatpush.xpose.msra.mxu0 0.0
      %939 = vmatpush.xpose.msra.mxu0 0.0
      %940 = vmatpush.xpose.msra.mxu0 0.0
      %941 = vmatpush.xpose.msra.mxu0 0.0
      %942 = vmatpush.xpose.msra.mxu0 0.0
      %943 = vmatpush.xpose.msra.mxu0 0.0
      %944 = vmatpush.xpose.msra.mxu0 0.0
      %945 = vmatpush.xpose.msra.mxu0 0.0
      %946 = vmatpush.xpose.msra.mxu0 0.0
      %947 = vmatpush.xpose.msra.mxu0 0.0
      %948 = vmatpush.xpose.msra.mxu0 0.0
      %949 = vmatpush.xpose.msra.mxu0 0.0
      %950 = vmatpush.xpose.msra.mxu0 0.0
      %v951 = vand.u32 %v293, 4294901760
      %v952 = vsub.f32 %v293, %v951
      %953 = vmatpush.xpose.msra.mxu0 %v952
      %v954 = vand.u32 %v737, 4294901760
      %v955 = vsub.f32 %v737, %v954
      %956 = vmatmul.f32.gmra.mxu0 %v955
      %v957 = vpop.f32.mrf.mxu0
      %v958 = vadd.f32 %v934, %v957
      %959 = vdwg.mxu0
      %960 = vmatpush.xpose.msra.mxu0 0.0
      %961 = vmatpush.xpose.msra.mxu0 0.0
      %962 = vmatpush.xpose.msra.mxu0 0.0
      %963 = vmatpush.xpose.msra.mxu0 0.0
      %964 = vmatpush.xpose.msra.mxu0 0.0
      %965 = vmatpush.xpose.msra.mxu0 0.0
      %966 = vmatpush.xpose.msra.mxu0 0.0
      %967 = vmatpush.xpose.msra.mxu0 0.0
      %968 = vmatpush.xpose.msra.mxu0 0.0
      %969 = vmatpush.xpose.msra.mxu0 0.0
      %970 = vmatpush.xpose.msra.mxu0 0.0
      %971 = vmatpush.xpose.msra.mxu0 0.0
      %972 = vmatpush.xpose.msra.mxu0 0.0
      %973 = vmatpush.xpose.msra.mxu0 0.0
      %974 = vmatpush.xpose.msra.mxu0 0.0
      %v975 = vand.u32 %v293, 4294901760
      %976 = vmatpush.xpose.msra.mxu0 %v975
      %v977 = vand.u32 %v737, 4294901760
      %v978 = vsub.f32 %v737, %v977
      %v979 = vand.u32 %v978, 4294901760
      %980 = vmatmul.f32.gmra.mxu0 %v979
      %v981 = vpop.f32.mrf.mxu0
      %v982 = vadd.f32 %v958, %v981
      %983 = vdwg.mxu0
      %984 = vmatpush.xpose.msra.mxu0 0.0
      %985 = vmatpush.xpose.msra.mxu0 0.0
      %986 = vmatpush.xpose.msra.mxu0 0.0
      %987 = vmatpush.xpose.msra.mxu0 0.0
      %988 = vmatpush.xpose.msra.mxu0 0.0
      %989 = vmatpush.xpose.msra.mxu0 0.0
      %990 = vmatpush.xpose.msra.mxu0 0.0
      %991 = vmatpush.xpose.msra.mxu0 0.0
      %992 = vmatpush.xpose.msra.mxu0 0.0
      %993 = vmatpush.xpose.msra.mxu0 0.0
      %994 = vmatpush.xpose.msra.mxu0 0.0
      %995 = vmatpush.xpose.msra.mxu0 0.0
      %996 = vmatpush.xpose.msra.mxu0 0.0
      %997 = vmatpush.xpose.msra.mxu0 0.0
      %998 = vmatpush.xpose.msra.mxu0 0.0
      %v999 = vand.u32 %v293, 4294901760
      %v1000 = vsub.f32 %v293, %v999
      %v1001 = vand.u32 %v1000, 4294901760
      %1002 = vmatpush.xpose.msra.mxu0 %v1001
      %v1003 = vand.u32 %v737, 4294901760
      %1004 = vmatmul.f32.gmra.mxu0 %v1003
      %v1005 = vpop.f32.mrf.mxu0
      %v1006 = vadd.f32 %v982, %v1005
      %1007 = vdwg.mxu0
      %1008 = vmatpush.xpose.msra.mxu0 0.0
      %1009 = vmatpush.xpose.msra.mxu0 0.0
      %1010 = vmatpush.xpose.msra.mxu0 0.0
      %1011 = vmatpush.xpose.msra.mxu0 0.0
      %1012 = vmatpush.xpose.msra.mxu0 0.0
      %1013 = vmatpush.xpose.msra.mxu0 0.0
      %1014 = vmatpush.xpose.msra.mxu0 0.0
      %1015 = vmatpush.xpose.msra.mxu0 0.0
      %1016 = vmatpush.xpose.msra.mxu0 0.0
      %1017 = vmatpush.xpose.msra.mxu0 0.0
      %1018 = vmatpush.xpose.msra.mxu0 0.0
      %1019 = vmatpush.xpose.msra.mxu0 0.0
      %1020 = vmatpush.xpose.msra.mxu0 0.0
      %1021 = vmatpush.xpose.msra.mxu0 0.0
      %1022 = vmatpush.xpose.msra.mxu0 0.0
      %v1023 = vand.u32 %v293, 4294901760
      %1024 = vmatpush.xpose.msra.mxu0 %v1023
      %v1025 = vand.u32 %v737, 4294901760
      %1026 = vmatmul.f32.gmra.mxu0 %v1025
      %v1027 = vpop.f32.mrf.mxu0
      %v1028 = vadd.f32 %v1006, %v1027
      %1029 = vdwg.mxu0
      %vm1030 = vcmask 48128
      %1031 = vst.msk [vmem:[%s289] sm:$0xff] %vm1030, %v1028
      %v1034 = vrot.slane %v702, 4
      %v1035 = vrot.slane %v715, 4
      %v1038 = vsel %vm724, %v676, %v1034
      %v1039 = vsel %vm724, %v689, %v1035
      %v1040 = vmul.f32 %v1038, 10.0
      %v1041 = vmul.f32 %v1039, 10.0
      %v1042 = vmax.f32 %v1040, %v1041
      %1043 = vmax.xlane.f32.xlu0 %v1042
      %v1044 = vpop.xlane.xlu0 %1043
      %v1045 = vsub.f32 %v1040, %v1044
      %v1046 = vsub.f32 %v1041, %v1044
      %v1047 = vmul.f32 %v1045, 1.442695
      %v1048 = vpow.pop %v1047
      %v1049 = vmul.f32 %v1046, 1.442695
      %v1050 = vpow.pop %v1049
      %1051 = vmatpush.xpose.msra.mxu0 0.0
      %1052 = vmatpush.xpose.msra.mxu0 0.0
      %1053 = vmatpush.xpose.msra.mxu0 0.0
      %1054 = vmatpush.xpose.msra.mxu0 0.0
      %1055 = vmatpush.xpose.msra.mxu0 0.0
      %1056 = vmatpush.xpose.msra.mxu0 0.0
      %1057 = vmatpush.xpose.msra.mxu0 0.0
      %1058 = vmatpush.xpose.msra.mxu0 0.0
      %1059 = vmatpush.xpose.msra.mxu0 0.0
      %1060 = vmatpush.xpose.msra.mxu0 0.0
      %1061 = vmatpush.xpose.msra.mxu0 0.0
      %1062 = vmatpush.xpose.msra.mxu0 0.0
      %1063 = vmatpush.xpose.msra.mxu0 0.0
      %1064 = vmatpush.xpose.msra.mxu0 0.0
      %1065 = vmatpush.xpose.msra.mxu0 0.0
      %v1066 = vand.u32 %v292, 4294901760
      %1067 = vmatpush.xpose.msra.mxu0 %v1066
      %v1068 = vand.u32 %v1048, 4294901760
      %v1069 = vsub.f32 %v1048, %v1068
      %v1070 = vand.u32 %v1069, 4294901760
      %v1071 = vsub.f32 %v1069, %v1070
      %v1072 = vand.u32 %v1071, 4294901760
      %1073 = vmatmul.f32.gmra.mxu0 %v1072
      %v1074 = vpop.f32.mrf.mxu0
      %v1075 = vadd.f32 0.0, %v1074
      %1076 = vdwg.mxu0
      %1077 = vmatpush.xpose.msra.mxu0 0.0
      %1078 = vmatpush.xpose.msra.mxu0 0.0
      %1079 = vmatpush.xpose.msra.mxu0 0.0
      %1080 = vmatpush.xpose.msra.mxu0 0.0
      %1081 = vmatpush.xpose.msra.mxu0 0.0
      %1082 = vmatpush.xpose.msra.mxu0 0.0
      %1083 = vmatpush.xpose.msra.mxu0 0.0
      %1084 = vmatpush.xpose.msra.mxu0 0.0
      %1085 = vmatpush.xpose.msra.mxu0 0.0
      %1086 = vmatpush.xpose.msra.mxu0 0.0
      %1087 = vmatpush.xpose.msra.mxu0 0.0
      %1088 = vmatpush.xpose.msra.mxu0 0.0
      %1089 = vmatpush.xpose.msra.mxu0 0.0
      %1090 = vmatpush.xpose.msra.mxu0 0.0
      %1091 = vmatpush.xpose.msra.mxu0 0.0
      %v1092 = vand.u32 %v292, 4294901760
      %v1093 = vsub.f32 %v292, %v1092
      %v1094 = vand.u32 %v1093, 4294901760
      %v1095 = vsub.f32 %v1093, %v1094
      %v1096 = vand.u32 %v1095, 4294901760
      %1097 = vmatpush.xpose.msra.mxu0 %v1096
      %v1098 = vand.u32 %v1048, 4294901760
      %1099 = vmatmul.f32.gmra.mxu0 %v1098
      %v1100 = vpop.f32.mrf.mxu0
      %v1101 = vadd.f32 %v1075, %v1100
      %1102 = vdwg.mxu0
      %1103 = vmatpush.xpose.msra.mxu0 0.0
      %1104 = vmatpush.xpose.msra.mxu0 0.0
      %1105 = vmatpush.xpose.msra.mxu0 0.0
      %1106 = vmatpush.xpose.msra.mxu0 0.0
      %1107 = vmatpush.xpose.msra.mxu0 0.0
      %1108 = vmatpush.xpose.msra.mxu0 0.0
      %1109 = vmatpush.xpose.msra.mxu0 0.0
      %1110 = vmatpush.xpose.msra.mxu0 0.0
      %1111 = vmatpush.xpose.msra.mxu0 0.0
      %1112 = vmatpush.xpose.msra.mxu0 0.0
      %1113 = vmatpush.xpose.msra.mxu0 0.0
      %1114 = vmatpush.xpose.msra.mxu0 0.0
      %1115 = vmatpush.xpose.msra.mxu0 0.0
      %1116 = vmatpush.xpose.msra.mxu0 0.0
      %1117 = vmatpush.xpose.msra.mxu0 0.0
      %v1118 = vand.u32 %v292, 4294901760
      %v1119 = vsub.f32 %v292, %v1118
      %1120 = vmatpush.xpose.msra.mxu0 %v1119
      %v1121 = vand.u32 %v1048, 4294901760
      %v1122 = vsub.f32 %v1048, %v1121
      %1123 = vmatmul.f32.gmra.mxu0 %v1122
      %v1124 = vpop.f32.mrf.mxu0
      %v1125 = vadd.f32 %v1101, %v1124
      %1126 = vdwg.mxu0
      %1127 = vmatpush.xpose.msra.mxu0 0.0
      %1128 = vmatpush.xpose.msra.mxu0 0.0
      %1129 = vmatpush.xpose.msra.mxu0 0.0
      %1130 = vmatpush.xpose.msra.mxu0 0.0
      %1131 = vmatpush.xpose.msra.mxu0 0.0
      %1132 = vmatpush.xpose.msra.mxu0 0.0
      %1133 = vmatpush.xpose.msra.mxu0 0.0
      %1134 = vmatpush.xpose.msra.mxu0 0.0
      %1135 = vmatpush.xpose.msra.mxu0 0.0
      %1136 = vmatpush.xpose.msra.mxu0 0.0
      %1137 = vmatpush.xpose.msra.mxu0 0.0
      %1138 = vmatpush.xpose.msra.mxu0 0.0
      %1139 = vmatpush.xpose.msra.mxu0 0.0
      %1140 = vmatpush.xpose.msra.mxu0 0.0
      %1141 = vmatpush.xpose.msra.mxu0 0.0
      %v1142 = vand.u32 %v292, 4294901760
      %1143 = vmatpush.xpose.msra.mxu0 %v1142
      %v1144 = vand.u32 %v1048, 4294901760
      %v1145 = vsub.f32 %v1048, %v1144
      %v1146 = vand.u32 %v1145, 4294901760
      %1147 = vmatmul.f32.gmra.mxu0 %v1146
      %v1148 = vpop.f32.mrf.mxu0
      %v1149 = vadd.f32 %v1125, %v1148
      %1150 = vdwg.mxu0
      %1151 = vmatpush.xpose.msra.mxu0 0.0
      %1152 = vmatpush.xpose.msra.mxu0 0.0
      %1153 = vmatpush.xpose.msra.mxu0 0.0
      %1154 = vmatpush.xpose.msra.mxu0 0.0
      %1155 = vmatpush.xpose.msra.mxu0 0.0
      %1156 = vmatpush.xpose.msra.mxu0 0.0
      %1157 = vmatpush.xpose.msra.mxu0 0.0
      %1158 = vmatpush.xpose.msra.mxu0 0.0
      %1159 = vmatpush.xpose.msra.mxu0 0.0
      %1160 = vmatpush.xpose.msra.mxu0 0.0
      %1161 = vmatpush.xpose.msra.mxu0 0.0
      %1162 = vmatpush.xpose.msra.mxu0 0.0
      %1163 = vmatpush.xpose.msra.mxu0 0.0
      %1164 = vmatpush.xpose.msra.mxu0 0.0
      %1165 = vmatpush.xpose.msra.mxu0 0.0
      %v1166 = vand.u32 %v292, 4294901760
      %v1167 = vsub.f32 %v292, %v1166
      %v1168 = vand.u32 %v1167, 4294901760
      %1169 = vmatpush.xpose.msra.mxu0 %v1168
      %v1170 = vand.u32 %v1048, 4294901760
      %1171 = vmatmul.f32.gmra.mxu0 %v1170
      %v1172 = vpop.f32.mrf.mxu0
      %v1173 = vadd.f32 %v1149, %v1172
      %1174 = vdwg.mxu0
      %1175 = vmatpush.xpose.msra.mxu0 0.0
      %1176 = vmatpush.xpose.msra.mxu0 0.0
      %1177 = vmatpush.xpose.msra.mxu0 0.0
      %1178 = vmatpush.xpose.msra.mxu0 0.0
      %1179 = vmatpush.xpose.msra.mxu0 0.0
      %1180 = vmatpush.xpose.msra.mxu0 0.0
      %1181 = vmatpush.xpose.msra.mxu0 0.0
      %1182 = vmatpush.xpose.msra.mxu0 0.0
      %1183 = vmatpush.xpose.msra.mxu0 0.0
      %1184 = vmatpush.xpose.msra.mxu0 0.0
      %1185 = vmatpush.xpose.msra.mxu0 0.0
      %1186 = vmatpush.xpose.msra.mxu0 0.0
      %1187 = vmatpush.xpose.msra.mxu0 0.0
      %1188 = vmatpush.xpose.msra.mxu0 0.0
      %1189 = vmatpush.xpose.msra.mxu0 0.0
      %v1190 = vand.u32 %v292, 4294901760
      %1191 = vmatpush.xpose.msra.mxu0 %v1190
      %v1192 = vand.u32 %v1048, 4294901760
      %1193 = vmatmul.f32.gmra.mxu0 %v1192
      %v1194 = vpop.f32.mrf.mxu0
      %v1195 = vadd.f32 %v1173, %v1194
      %1196 = vdwg.mxu0
      %1197 = vmatpush.xpose.msra.mxu0 0.0
      %1198 = vmatpush.xpose.msra.mxu0 0.0
      %1199 = vmatpush.xpose.msra.mxu0 0.0
      %1200 = vmatpush.xpose.msra.mxu0 0.0
      %1201 = vmatpush.xpose.msra.mxu0 0.0
      %1202 = vmatpush.xpose.msra.mxu0 0.0
      %1203 = vmatpush.xpose.msra.mxu0 0.0
      %1204 = vmatpush.xpose.msra.mxu0 0.0
      %1205 = vmatpush.xpose.msra.mxu0 0.0
      %1206 = vmatpush.xpose.msra.mxu0 0.0
      %1207 = vmatpush.xpose.msra.mxu0 0.0
      %1208 = vmatpush.xpose.msra.mxu0 0.0
      %1209 = vmatpush.xpose.msra.mxu0 0.0
      %1210 = vmatpush.xpose.msra.mxu0 0.0
      %1211 = vmatpush.xpose.msra.mxu0 0.0
      %v1212 = vand.u32 %v293, 4294901760
      %1213 = vmatpush.xpose.msra.mxu0 %v1212
      %v1214 = vand.u32 %v1050, 4294901760
      %v1215 = vsub.f32 %v1050, %v1214
      %v1216 = vand.u32 %v1215, 4294901760
      %v1217 = vsub.f32 %v1215, %v1216
      %v1218 = vand.u32 %v1217, 4294901760
      %1219 = vmatmul.f32.gmra.mxu0 %v1218
      %v1220 = vpop.f32.mrf.mxu0
      %v1221 = vadd.f32 %v1195, %v1220
      %1222 = vdwg.mxu0
      %1223 = vmatpush.xpose.msra.mxu0 0.0
      %1224 = vmatpush.xpose.msra.mxu0 0.0
      %1225 = vmatpush.xpose.msra.mxu0 0.0
      %1226 = vmatpush.xpose.msra.mxu0 0.0
      %1227 = vmatpush.xpose.msra.mxu0 0.0
      %1228 = vmatpush.xpose.msra.mxu0 0.0
      %1229 = vmatpush.xpose.msra.mxu0 0.0
      %1230 = vmatpush.xpose.msra.mxu0 0.0
      %1231 = vmatpush.xpose.msra.mxu0 0.0
      %1232 = vmatpush.xpose.msra.mxu0 0.0
      %1233 = vmatpush.xpose.msra.mxu0 0.0
      %1234 = vmatpush.xpose.msra.mxu0 0.0
      %1235 = vmatpush.xpose.msra.mxu0 0.0
      %1236 = vmatpush.xpose.msra.mxu0 0.0
      %1237 = vmatpush.xpose.msra.mxu0 0.0
      %v1238 = vand.u32 %v293, 4294901760
      %v1239 = vsub.f32 %v293, %v1238
      %v1240 = vand.u32 %v1239, 4294901760
      %v1241 = vsub.f32 %v1239, %v1240
      %v1242 = vand.u32 %v1241, 4294901760
      %1243 = vmatpush.xpose.msra.mxu0 %v1242
      %v1244 = vand.u32 %v1050, 4294901760
      %1245 = vmatmul.f32.gmra.mxu0 %v1244
      %v1246 = vpop.f32.mrf.mxu0
      %v1247 = vadd.f32 %v1221, %v1246
      %1248 = vdwg.mxu0
      %1249 = vmatpush.xpose.msra.mxu0 0.0
      %1250 = vmatpush.xpose.msra.mxu0 0.0
      %1251 = vmatpush.xpose.msra.mxu0 0.0
      %1252 = vmatpush.xpose.msra.mxu0 0.0
      %1253 = vmatpush.xpose.msra.mxu0 0.0
      %1254 = vmatpush.xpose.msra.mxu0 0.0
      %1255 = vmatpush.xpose.msra.mxu0 0.0
      %1256 = vmatpush.xpose.msra.mxu0 0.0
      %1257 = vmatpush.xpose.msra.mxu0 0.0
      %1258 = vmatpush.xpose.msra.mxu0 0.0
      %1259 = vmatpush.xpose.msra.mxu0 0.0
      %1260 = vmatpush.xpose.msra.mxu0 0.0
      %1261 = vmatpush.xpose.msra.mxu0 0.0
      %1262 = vmatpush.xpose.msra.mxu0 0.0
      %1263 = vmatpush.xpose.msra.mxu0 0.0
      %v1264 = vand.u32 %v293, 4294901760
      %v1265 = vsub.f32 %v293, %v1264
      %1266 = vmatpush.xpose.msra.mxu0 %v1265
      %v1267 = vand.u32 %v1050, 4294901760
      %v1268 = vsub.f32 %v1050, %v1267
      %1269 = vmatmul.f32.gmra.mxu0 %v1268
      %v1270 = vpop.f32.mrf.mxu0
      %v1271 = vadd.f32 %v1247, %v1270
      %1272 = vdwg.mxu0
      %1273 = vmatpush.xpose.msra.mxu0 0.0
      %1274 = vmatpush.xpose.msra.mxu0 0.0
      %1275 = vmatpush.xpose.msra.mxu0 0.0
      %1276 = vmatpush.xpose.msra.mxu0 0.0
      %1277 = vmatpush.xpose.msra.mxu0 0.0
      %1278 = vmatpush.xpose.msra.mxu0 0.0
      %1279 = vmatpush.xpose.msra.mxu0 0.0
      %1280 = vmatpush.xpose.msra.mxu0 0.0
      %1281 = vmatpush.xpose.msra.mxu0 0.0
      %1282 = vmatpush.xpose.msra.mxu0 0.0
      %1283 = vmatpush.xpose.msra.mxu0 0.0
      %1284 = vmatpush.xpose.msra.mxu0 0.0
      %1285 = vmatpush.xpose.msra.mxu0 0.0
      %1286 = vmatpush.xpose.msra.mxu0 0.0
      %1287 = vmatpush.xpose.msra.mxu0 0.0
      %v1288 = vand.u32 %v293, 4294901760
      %1289 = vmatpush.xpose.msra.mxu0 %v1288
      %v1290 = vand.u32 %v1050, 4294901760
      %v1291 = vsub.f32 %v1050, %v1290
      %v1292 = vand.u32 %v1291, 4294901760
      %1293 = vmatmul.f32.gmra.mxu0 %v1292
      %v1294 = vpop.f32.mrf.mxu0
      %v1295 = vadd.f32 %v1271, %v1294
      %1296 = vdwg.mxu0
      %1297 = vmatpush.xpose.msra.mxu0 0.0
      %1298 = vmatpush.xpose.msra.mxu0 0.0
      %1299 = vmatpush.xpose.msra.mxu0 0.0
      %1300 = vmatpush.xpose.msra.mxu0 0.0
      %1301 = vmatpush.xpose.msra.mxu0 0.0
      %1302 = vmatpush.xpose.msra.mxu0 0.0
      %1303 = vmatpush.xpose.msra.mxu0 0.0
      %1304 = vmatpush.xpose.msra.mxu0 0.0
      %1305 = vmatpush.xpose.msra.mxu0 0.0
      %1306 = vmatpush.xpose.msra.mxu0 0.0
      %1307 = vmatpush.xpose.msra.mxu0 0.0
      %1308 = vmatpush.xpose.msra.mxu0 0.0
      %1309 = vmatpush.xpose.msra.mxu0 0.0
      %1310 = vmatpush.xpose.msra.mxu0 0.0
      %1311 = vmatpush.xpose.msra.mxu0 0.0
      %v1312 = vand.u32 %v293, 4294901760
      %v1313 = vsub.f32 %v293, %v1312
      %v1314 = vand.u32 %v1313, 4294901760
      %1315 = vmatpush.xpose.msra.mxu0 %v1314
      %v1316 = vand.u32 %v1050, 4294901760
      %1317 = vmatmul.f32.gmra.mxu0 %v1316
      %v1318 = vpop.f32.mrf.mxu0
      %v1319 = vadd.f32 %v1295, %v1318
      %1320 = vdwg.mxu0
      %1321 = vmatpush.xpose.msra.mxu0 0.0
      %1322 = vmatpush.xpose.msra.mxu0 0.0
      %1323 = vmatpush.xpose.msra.mxu0 0.0
      %1324 = vmatpush.xpose.msra.mxu0 0.0
      %1325 = vmatpush.xpose.msra.mxu0 0.0
      %1326 = vmatpush.xpose.msra.mxu0 0.0
      %1327 = vmatpush.xpose.msra.mxu0 0.0
      %1328 = vmatpush.xpose.msra.mxu0 0.0
      %1329 = vmatpush.xpose.msra.mxu0 0.0
      %1330 = vmatpush.xpose.msra.mxu0 0.0
      %1331 = vmatpush.xpose.msra.mxu0 0.0
      %1332 = vmatpush.xpose.msra.mxu0 0.0
      %1333 = vmatpush.xpose.msra.mxu0 0.0
      %1334 = vmatpush.xpose.msra.mxu0 0.0
      %1335 = vmatpush.xpose.msra.mxu0 0.0
      %v1336 = vand.u32 %v293, 4294901760
      %1337 = vmatpush.xpose.msra.mxu0 %v1336
      %v1338 = vand.u32 %v1050, 4294901760
      %1339 = vmatmul.f32.gmra.mxu0 %v1338
      %v1340 = vpop.f32.mrf.mxu0
      %v1341 = vadd.f32 %v1319, %v1340
      %1342 = vdwg.mxu0
      %1343 = vst.msk [vmem:[%s289 + $0x8] sm:$0xff] %vm1030, %v1341
      %s1344 = smul.u32 2, %s22
      %p1345 = scmp.lt.s32.totalorder %s21, 1
      %s1346 = scalar_select %p1345, %s21, 1
      %p1347 = scmp.lt.s32.totalorder %s1344, 1
      %s1348 = scalar_select %p1347, %s1344, 1
      %s1349 = smul.addr %s1346, 2
      %s1350 = sadd.s32 %s1348, %s1349
      %s1351 = smul.addr %s1350, 8
      %s1352 = scalar_lea.vmem %s6, %s1351
      // Predicated region
      $region45: #{keypoint_detector_forward.1} parent=43 // pred_check
        %p1353 = pneg %p182
      $region46: #{keypoint_detector_forward.1} parent=43 // pred_check_branch
        %1355 = sbr.rel (%p1353) target = $region48
      $region47: #{keypoint_detector_forward.1} parent=43 // pred_region
        %s1356 = smul.u32 2, %s22
      $region48: #{keypoint_detector_forward.1} parent=43 // pred_fallthru
        _
    $region44: #{keypoint_detector_forward.1} parent=5 // pred_fallthru
      _
    %p1357 = scmp.le.s32.totalorder 2, %s12
    // Predicated region
    $region49: #{keypoint_detector_forward.1} parent=5 // pred_check
      %p1358 = pneg %p1357
    $region50: #{keypoint_detector_forward.1} parent=5 // pred_check_branch
      %1360 = sbr.rel (%p1358) target = $region52
    $region51: #{keypoint_detector_forward.1} parent=5 // pred_region
      %s1361 = ssub.s32 %s12, 2
      // Predicated region
      $region53: #{keypoint_detector_forward.1} parent=51 // pred_check
        %p1362 = pneg %p188
      $region54: #{keypoint_detector_forward.1} parent=51 // pred_check_branch
        %1364 = sbr.rel (%p1362) target = $region56
      $region55: #{keypoint_detector_forward.1} parent=51 // pred_region
        %s1365 = smul.u32 2, %s24
        %p1366 = scmp.lt.s32.totalorder %s23, 1
        %s1367 = scalar_select %p1366, %s23, 1
        %p1368 = scmp.lt.s32.totalorder %s1365, 1
        %s1369 = scalar_select %p1368, %s1365, 1
        %s1370 = smul.addr %s1367, 2
        %s1371 = sadd.s32 %s1369, %s1370
        %s1372 = smul.addr %s1371, 8
        %s1373 = scalar_lea.vmem %s6, %s1372
      $region56: #{keypoint_detector_forward.1} parent=51 // pred_fallthru
        _
    $region52: #{keypoint_detector_forward.1} parent=5 // pred_fallthru
      _
  $region6: #{keypoint_detector_forward.1} parent=0 // loop_footer
    %s16 = sadd.s32 1, %s12
  $region7: #{keypoint_detector_forward.1} parent=0 // loop_footer_branch
    %11 = sbr.rel target = $region3
  $region8: #{keypoint_detector_forward.1} parent=0 // loop_exit
    _

</llo_original>
